<compile_context>
chip_gen: v6e
topology: v6e:2x2x1
jax: 0.10.0
libtpu: 0.0.40
codegen_flags: <defaults>
</compile_context>

<pallas_src>
import functools

import jax
import jax.numpy as jnp
from jax import lax
from jax.experimental import pallas as pl
from jax.experimental.pallas import tpu as pltpu

# Module hyper-parameters (CombinedLoss.__init__ / DiceBCELoss.forward defaults)
TEMPERATURE = 1.0
KL_WEIGHT = 1.0
DICE_WEIGHT = 20.0
SMOOTH = 1.0

LANE = 1024          # lane-dense trailing dim (multiple of 128)
TM_MAX = 512         # rows per grid step: 512*1024*4 B = 2 MiB per input tile
NCORES = 2           # leading "parallel" grid axis (v7x dual TensorCore)
_BAND = 8            # rows per accumulation band (one f32 sublane group)
_BAND_ELEMS = _BAND * LANE


def _cdiv(a, b):
    return -(-a // b)


def _round_up(a, b):
    return _cdiv(a, b) * b


def _accumulate_tile(s_ref, t_ref, x_ref, y_ref,
                     kl_acc, bce_acc, inter_acc, denom_acc, *, tm, rem):
    """Fold one (tm, LANE) tile onto (8, LANE) accumulators, 8 rows at a time.

    `rem` (Python int) is the number of valid elements in this tile in
    row-major order; everything past it (LANE zero-padding, partial-boundary
    garbage rows) is masked out exactly. Fully-invalid bands are skipped at
    trace time, so only the straddling band pays for the mask selects.
    """
    for b in range(tm // _BAND):
        band_rem = rem - b * _BAND_ELEMS
        if band_rem <= 0:
            break
        rows = pl.ds(b * _BAND, _BAND)
        s = s_ref[rows, :]
        t = t_ref[rows, :]
        x = x_ref[rows, :]
        y = y_ref[rows, :]

        if TEMPERATURE != 1.0:               # skip 2 divides/element when T == 1
            s = s / TEMPERATURE
            t = t / TEMPERATURE

        # ---- KL pointwise term (PyTorch F.kl_div zeroes target <= 0) -------
        s_log = jnp.log(s + 1e-8)
        kl_pt = jnp.where(t > 0.0, t * (jnp.log(t) - s_log), 0.0)

        # ---- Stable BCEWithLogits pointwise term, reuse e = exp(-|x|) ------
        e = jnp.exp(-jnp.abs(x))
        bce_pt = jnp.maximum(x, 0.0) - x * y + jnp.log1p(e)
        r = 1.0 / (1.0 + e)                  # exact divide keeps 1e-5 tolerance
        sig = jnp.where(x >= 0.0, r, 1.0 - r)

        inter_pt = sig * y
        denom_pt = sig + y                   # merged dice denominator

        if band_rem < _BAND_ELEMS:
            idx = (lax.broadcasted_iota(jnp.int32, (_BAND, LANE), 0) * LANE +
                   lax.broadcasted_iota(jnp.int32, (_BAND, LANE), 1))
            valid = idx < band_rem
            zero = jnp.float32(0.0)
            kl_pt = jnp.where(valid, kl_pt, zero)
            bce_pt = jnp.where(valid, bce_pt, zero)
            inter_pt = jnp.where(valid, inter_pt, zero)
            denom_pt = jnp.where(valid, denom_pt, zero)

        # Pure VPU vreg adds into the (8, LANE) bins (hierarchical f32 sums).
        kl_acc[...] += kl_pt
        bce_acc[...] += bce_pt
        inter_acc[...] += inter_pt
        denom_acc[...] += denom_pt
    # TODO(synk): if a v7x bundle dump shows VALU as the saturating slot after
    # the 2-TC split, offload this row-fold to the idle MXU with a constant
    # selector matmul (precision=HIGHEST).


def _combined_loss_kernel(s_ref, t_ref, x_ref, y_ref, out_ref,
                          kl_acc, bce_acc, inter_acc, denom_acc,
                          *, tm, num_tiles, num_inner, rem_last, uniform):
    c = pl.program_id(0)
    i = pl.program_id(1)
    tile_id = c * num_inner + i
    full = tm * LANE

    @pl.when(i == 0)
    def _init():
        kl_acc[...] = jnp.zeros_like(kl_acc)
        bce_acc[...] = jnp.zeros_like(bce_acc)
        inter_acc[...] = jnp.zeros_like(inter_acc)
        denom_acc[...] = jnp.zeros_like(denom_acc)

    acc = functools.partial(_accumulate_tile, s_ref, t_ref, x_ref, y_ref,
                            kl_acc, bce_acc, inter_acc, denom_acc, tm=tm)

    if uniform:
        # Every grid step maps to a distinct, fully-valid tile.
        acc(rem=full)
    else:
        if num_tiles > 1:
            @pl.when(tile_id < num_tiles - 1)
            def _full_tiles():
                acc(rem=full)

        @pl.when(tile_id == num_tiles - 1)
        def _last_tile():
            acc(rem=rem_last)
        # tile_id >= num_tiles: phantom step on the last core; contributes 0.

    @pl.when(i == num_inner - 1)
    def _finalize():
        out_ref[0, 0] = jnp.sum(kl_acc[...])
        out_ref[0, 1] = jnp.sum(bce_acc[...])
        out_ref[0, 2] = jnp.sum(inter_acc[...])
        out_ref[0, 3] = jnp.sum(denom_acc[...])


def combined_loss(student_logits, teacher_logits, inputs, targets):
    """JAX/Pallas equivalent of CombinedLoss.forward (NCHW inputs)."""
    batch = student_logits.shape[0]          # kl_div 'batchmean' denominator
    n_valid = inputs.size                    # BCE mean denominator / mask bound

    rows = _cdiv(n_valid, LANE)
    padded_elems = rows * LANE

    def to_slab(a):
        flat = a.reshape(-1).astype(jnp.float32)
        if padded_elems != n_valid:
            # < LANE zero-pad elements, masked inside the kernel.  When
            # n_valid % LANE == 0 this is a pure reshape (no HBM copy).
            flat = jnp.pad(flat, (0, padded_elems - n_valid))
        return flat.reshape(rows, LANE)

    s2 = to_slab(student_logits)
    t2 = to_slab(teacher_logits)
    x2 = to_slab(inputs)
    y2 = to_slab(targets)
    # TODO(synk): if the caller can produce 0/1 targets as bf16/int8 upstream,
    # streaming them narrower saves ~12-19% HBM traffic on v5e/v6e.

    tm = min(TM_MAX, _round_up(rows, _BAND))
    num_tiles = _cdiv(rows, tm)
    ncores = min(NCORES, num_tiles)          # don't spin up an idle second core
    num_inner = _cdiv(num_tiles, ncores)
    rem_last = n_valid - (num_tiles - 1) * tm * LANE
    uniform = (rem_last == tm * LANE) and (ncores * num_inner == num_tiles)

    if ncores * num_inner == num_tiles:
        def in_idx(c, i):
            return (c * num_inner + i, 0)
    else:
        # Phantom final step on the last core: clamp to the last real block
        # (a redundant in-bounds read); the kernel skips its contribution.
        def in_idx(c, i):
            return (jnp.minimum(c * num_inner + i, num_tiles - 1), 0)

    in_spec = pl.BlockSpec((tm, LANE), in_idx)
    # TODO(synk): on v6e, sweep pipeline_mode=pl.Buffered(3) on in_spec if the
    # trace still shows exposed DMA waits between grid steps.

    kernel = functools.partial(_combined_loss_kernel, tm=tm,
                               num_tiles=num_tiles, num_inner=num_inner,
                               rem_last=rem_last, uniform=uniform)

    partials = pl.pallas_call(
        kernel,
        out_shape=jax.ShapeDtypeStruct((ncores, 4), jnp.float32),
        grid_spec=pltpu.PrefetchScalarGridSpec(
            num_scalar_prefetch=0,
            grid=(ncores, num_inner),
            in_specs=[in_spec, in_spec, in_spec, in_spec],
            out_specs=pl.BlockSpec((1, 4), lambda c, i: (c, 0),
                                   memory_space=pltpu.MemorySpace.SMEM),
            scratch_shapes=[pltpu.VMEM((_BAND, LANE), jnp.float32)
                            for _ in range(4)]),
        compiler_params=pltpu.CompilerParams(
            dimension_semantics=("parallel", "arbitrary"),
            vmem_limit_bytes=32 * 1024 * 1024),
    )(s2, t2, x2, y2)

    # Combine per-core partial sums; tiny scalar arithmetic stays in JAX.
    sums = jnp.sum(partials, axis=0)
    kl_loss = (sums[0] / batch) * (TEMPERATURE ** 2)
    bce = sums[1] / n_valid
    dice = 1.0 - (2.0 * sums[2] + SMOOTH) / (sums[3] + SMOOTH)
    return KL_WEIGHT * kl_loss + DICE_WEIGHT * (bce + dice)


def _reference_loss(student, teacher, inputs, targets):
    """Plain-JAX reference replicating the PyTorch semantics."""
    n = student.shape[0]
    sp = student / TEMPERATURE
    tp = teacher / TEMPERATURE
    s_log = jnp.log(sp + 1e-8)
    kl_pt = jnp.where(tp > 0.0, tp * (jnp.log(tp) - s_log), 0.0)
    kl = (jnp.sum(kl_pt) / n) * (TEMPERATURE ** 2)

    x = inputs
    y = targets
    bce = jnp.mean(jnp.maximum(x, 0.0) - x * y + jnp.log1p(jnp.exp(-jnp.abs(x))))
    sig = jax.nn.sigmoid(x)
    inter = jnp.sum(sig * y)
    dice = 1.0 - (2.0 * inter + SMOOTH) / (jnp.sum(sig) + jnp.sum(y) + SMOOTH)
    return KL_WEIGHT * kl + DICE_WEIGHT * (bce + dice)


if __name__ == "__main__":
    key = jax.random.PRNGKey(0)

    def make_inputs(shape, k):
        k1, k2, k3, k4 = jax.random.split(k, 4)
        student = jax.nn.sigmoid(jax.random.normal(k1, shape, jnp.float32))
        teacher = jax.nn.sigmoid(jax.random.normal(k2, shape, jnp.float32))
        inputs = jax.random.normal(k3, shape, jnp.float32)
        targets = (jax.random.uniform(k4, shape) > 0.5).astype(jnp.float32)
        return student, teacher, inputs, targets

    shapes = [
        (2, 1, 16, 16),     # tiny: pad + in-kernel mask, single tile
        (2, 1, 512, 384),   # LANE-divisible: zero-copy reshape path
        (3, 1, 500, 700),   # multi-tile, 2-core split, phantom step, masked last tile
    ]
    for shape, k in zip(shapes, jax.random.split(key, len(shapes))):
        args = make_inputs(shape, k)
        got = jax.block_until_ready(combined_loss(*args))
        want = _reference_loss(*args)
        assert jnp.allclose(got, want, rtol=1e-5, atol=1e-5), (shape, got, want)

    print("KERNEL_OK")
</pallas_src>

<mosaic_0001>
module attributes {stable_mosaic.version = 11 : i64} {
  func.func @_combined_loss_kernel(%arg0: i32, %arg1: i32, %arg2: memref<8x1024xf32, #tpu.memory_space<vmem>>, %arg3: memref<8x1024xf32, #tpu.memory_space<vmem>>, %arg4: memref<8x1024xf32, #tpu.memory_space<vmem>>, %arg5: memref<8x1024xf32, #tpu.memory_space<vmem>>, %arg6: memref<1x4xf32, #tpu.memory_space<smem>>, %arg7: memref<8x1024xf32, #tpu.memory_space<vmem>>, %arg8: memref<8x1024xf32, #tpu.memory_space<vmem>>, %arg9: memref<8x1024xf32, #tpu.memory_space<vmem>>, %arg10: memref<8x1024xf32, #tpu.memory_space<vmem>>) attributes {dimension_semantics = [#tpu.dimension_semantics<parallel>, #tpu.dimension_semantics<arbitrary>], iteration_bounds = array<i64: 1, 1>, scalar_prefetch = 0 : i64, scratch_operands = 4 : i64, tpu.core_type = #tpu.core_type<tc>, window_params = [{transform_indices = @transform_0, window_bounds = array<i64: 8, 1024>}, {transform_indices = @transform_1, window_bounds = array<i64: 8, 1024>}, {transform_indices = @transform_2, window_bounds = array<i64: 8, 1024>}, {transform_indices = @transform_3, window_bounds = array<i64: 8, 1024>}, {transform_indices = @transform_4, window_bounds = array<i64: 1, 4>}]} {
    %c1_i32 = arith.constant 1 : i32
    %0 = arith.muli %arg0, %c1_i32 : i32
    %1 = arith.addi %0, %arg1 : i32
    %c0_i32 = arith.constant 0 : i32
    %2 = arith.cmpi eq, %arg1, %c0_i32 : i32
    %3 = arith.extui %2 : i1 to i32
    %c0_i32_0 = arith.constant 0 : i32
    %4 = arith.cmpi ne, %3, %c0_i32_0 : i32
    scf.if %4 {
      %cst = arith.constant 0.000000e+00 : f32
      %11 = vector.broadcast %cst : f32 to vector<8x1024xf32>
      %c0 = arith.constant 0 : index
      %c0_5 = arith.constant 0 : index
      %12 = vector.load %arg7[%c0, %c0_5] : memref<8x1024xf32, #tpu.memory_space<vmem>>, vector<8x1024xf32>
      tpu.vector_store %arg7[%c0, %c0_5], %11 {strides = array<i32>} : memref<8x1024xf32, #tpu.memory_space<vmem>>, vector<8x1024xf32>,
      %cst_6 = arith.constant 0.000000e+00 : f32
      %13 = vector.broadcast %cst_6 : f32 to vector<8x1024xf32>
      %c0_7 = arith.constant 0 : index
      %c0_8 = arith.constant 0 : index
      %14 = vector.load %arg8[%c0_7, %c0_8] : memref<8x1024xf32, #tpu.memory_space<vmem>>, vector<8x1024xf32>
      tpu.vector_store %arg8[%c0_7, %c0_8], %13 {strides = array<i32>} : memref<8x1024xf32, #tpu.memory_space<vmem>>, vector<8x1024xf32>,
      %cst_9 = arith.constant 0.000000e+00 : f32
      %15 = vector.broadcast %cst_9 : f32 to vector<8x1024xf32>
      %c0_10 = arith.constant 0 : index
      %c0_11 = arith.constant 0 : index
      %16 = vector.load %arg9[%c0_10, %c0_11] : memref<8x1024xf32, #tpu.memory_space<vmem>>, vector<8x1024xf32>
      tpu.vector_store %arg9[%c0_10, %c0_11], %15 {strides = array<i32>} : memref<8x1024xf32, #tpu.memory_space<vmem>>, vector<8x1024xf32>,
      %cst_12 = arith.constant 0.000000e+00 : f32
      %17 = vector.broadcast %cst_12 : f32 to vector<8x1024xf32>
      %c0_13 = arith.constant 0 : index
      %c0_14 = arith.constant 0 : index
      %18 = vector.load %arg10[%c0_13, %c0_14] : memref<8x1024xf32, #tpu.memory_space<vmem>>, vector<8x1024xf32>
      tpu.vector_store %arg10[%c0_13, %c0_14], %17 {strides = array<i32>} : memref<8x1024xf32, #tpu.memory_space<vmem>>, vector<8x1024xf32>,
    } else {
    }
    %c0_i32_1 = arith.constant 0 : i32
    %5 = arith.cmpi eq, %1, %c0_i32_1 : i32
    %6 = arith.extui %5 : i1 to i32
    %c0_i32_2 = arith.constant 0 : i32
    %7 = arith.cmpi ne, %6, %c0_i32_2 : i32
    scf.if %7 {
      %c0 = arith.constant 0 : index
      %c0_5 = arith.constant 0 : index
      %11 = vector.load %arg2[%c0, %c0_5] : memref<8x1024xf32, #tpu.memory_space<vmem>>, vector<8x1024xf32>
      %c0_6 = arith.constant 0 : index
      %c0_7 = arith.constant 0 : index
      %12 = vector.load %arg3[%c0_6, %c0_7] : memref<8x1024xf32, #tpu.memory_space<vmem>>, vector<8x1024xf32>
      %c0_8 = arith.constant 0 : index
      %c0_9 = arith.constant 0 : index
      %13 = vector.load %arg4[%c0_8, %c0_9] : memref<8x1024xf32, #tpu.memory_space<vmem>>, vector<8x1024xf32>
      %c0_10 = arith.constant 0 : index
      %c0_11 = arith.constant 0 : index
      %14 = vector.load %arg5[%c0_10, %c0_11] : memref<8x1024xf32, #tpu.memory_space<vmem>>, vector<8x1024xf32>
      %cst = arith.constant 9.99999993E-9 : f32
      %15 = vector.broadcast %cst : f32 to vector<8x1024xf32>
      %16 = arith.addf %11, %15 : vector<8x1024xf32>
      %17 = math.log %16 : vector<8x1024xf32>
      %cst_12 = arith.constant 0.000000e+00 : f32
      %18 = vector.broadcast %cst_12 : f32 to vector<8x1024xf32>
      %19 = arith.cmpf ogt, %12, %18 : vector<8x1024xf32>
      %20 = math.log %12 : vector<8x1024xf32>
      %21 = arith.subf %20, %17 : vector<8x1024xf32>
      %22 = arith.mulf %12, %21 : vector<8x1024xf32>
      %cst_13 = arith.constant 0.000000e+00 : f32
      %23 = vector.broadcast %cst_13 : f32 to vector<8x1024xf32>
      %24 = arith.select %19, %22, %23 : vector<8x1024xi1>, vector<8x1024xf32>
      %25 = math.absf %13 : vector<8x1024xf32>
      %cst_14 = arith.constant 0.000000e+00 : f32
      %26 = vector.broadcast %cst_14 : f32 to vector<8x1024xf32>
      %27 = arith.subf %26, %25 : vector<8x1024xf32>
      %28 = math.exp %27 : vector<8x1024xf32>
      %cst_15 = arith.constant 0.000000e+00 : f32
      %29 = vector.broadcast %cst_15 : f32 to vector<8x1024xf32>
      %30 = arith.maximumf %13, %29 : vector<8x1024xf32>
      %31 = arith.mulf %13, %14 : vector<8x1024xf32>
      %32 = arith.subf %30, %31 : vector<8x1024xf32>
      %33 = math.log1p %28 : vector<8x1024xf32>
      %34 = arith.addf %32, %33 : vector<8x1024xf32>
      %cst_16 = arith.constant 1.000000e+00 : f32
      %35 = vector.broadcast %cst_16 : f32 to vector<8x1024xf32>
      %36 = arith.addf %35, %28 : vector<8x1024xf32>
      %cst_17 = arith.constant 1.000000e+00 : f32
      %37 = vector.broadcast %cst_17 : f32 to vector<8x1024xf32>
      %38 = arith.divf %37, %36 : vector<8x1024xf32>
      %cst_18 = arith.constant 0.000000e+00 : f32
      %39 = vector.broadcast %cst_18 : f32 to vector<8x1024xf32>
      %40 = arith.cmpf oge, %13, %39 : vector<8x1024xf32>
      %cst_19 = arith.constant 1.000000e+00 : f32
      %41 = vector.broadcast %cst_19 : f32 to vector<8x1024xf32>
      %42 = arith.subf %41, %38 : vector<8x1024xf32>
      %43 = arith.select %40, %38, %42 : vector<8x1024xi1>, vector<8x1024xf32>
      %44 = arith.mulf %43, %14 : vector<8x1024xf32>
      %45 = arith.addf %43, %14 : vector<8x1024xf32>
      %46 = tpu.iota {dimensions = array<i32: 0>} : vector<8x1024xi32>
      %c1024_i32 = arith.constant 1024 : i32
      %47 = vector.broadcast %c1024_i32 : i32 to vector<8x1024xi32>
      %48 = arith.muli %46, %47 : vector<8x1024xi32>
      %49 = tpu.iota {dimensions = array<i32: 1>} : vector<8x1024xi32>
      %50 = arith.addi %48, %49 : vector<8x1024xi32>
      %c512_i32 = arith.constant 512 : i32
      %51 = vector.broadcast %c512_i32 : i32 to vector<8x1024xi32>
      %52 = arith.cmpi slt, %50, %51 : vector<8x1024xi32>
      %cst_20 = arith.constant 0.000000e+00 : f32
      %53 = vector.broadcast %cst_20 : f32 to vector<8x1024xf32>
      %54 = arith.select %52, %24, %53 : vector<8x1024xi1>, vector<8x1024xf32>
      %cst_21 = arith.constant 0.000000e+00 : f32
      %55 = vector.broadcast %cst_21 : f32 to vector<8x1024xf32>
      %56 = arith.select %52, %34, %55 : vector<8x1024xi1>, vector<8x1024xf32>
      %cst_22 = arith.constant 0.000000e+00 : f32
      %57 = vector.broadcast %cst_22 : f32 to vector<8x1024xf32>
      %58 = arith.select %52, %44, %57 : vector<8x1024xi1>, vector<8x1024xf32>
      %cst_23 = arith.constant 0.000000e+00 : f32
      %59 = vector.broadcast %cst_23 : f32 to vector<8x1024xf32>
      %60 = arith.select %52, %45, %59 : vector<8x1024xi1>, vector<8x1024xf32>
      %c0_24 = arith.constant 0 : index
      %c0_25 = arith.constant 0 : index
      %61 = vector.load %arg7[%c0_24, %c0_25] : memref<8x1024xf32, #tpu.memory_space<vmem>>, vector<8x1024xf32>
      %62 = arith.addf %61, %54 : vector<8x1024xf32>
      %c0_26 = arith.constant 0 : index
      %c0_27 = arith.constant 0 : index
      %63 = vector.load %arg7[%c0_26, %c0_27] : memref<8x1024xf32, #tpu.memory_space<vmem>>, vector<8x1024xf32>
      tpu.vector_store %arg7[%c0_26, %c0_27], %62 {strides = array<i32>} : memref<8x1024xf32, #tpu.memory_space<vmem>>, vector<8x1024xf32>,
      %c0_28 = arith.constant 0 : index
      %c0_29 = arith.constant 0 : index
      %64 = vector.load %arg8[%c0_28, %c0_29] : memref<8x1024xf32, #tpu.memory_space<vmem>>, vector<8x1024xf32>
      %65 = arith.addf %64, %56 : vector<8x1024xf32>
      %c0_30 = arith.constant 0 : index
      %c0_31 = arith.constant 0 : index
      %66 = vector.load %arg8[%c0_30, %c0_31] : memref<8x1024xf32, #tpu.memory_space<vmem>>, vector<8x1024xf32>
      tpu.vector_store %arg8[%c0_30, %c0_31], %65 {strides = array<i32>} : memref<8x1024xf32, #tpu.memory_space<vmem>>, vector<8x1024xf32>,
      %c0_32 = arith.constant 0 : index
      %c0_33 = arith.constant 0 : index
      %67 = vector.load %arg9[%c0_32, %c0_33] : memref<8x1024xf32, #tpu.memory_space<vmem>>, vector<8x1024xf32>
      %68 = arith.addf %67, %58 : vector<8x1024xf32>
      %c0_34 = arith.constant 0 : index
      %c0_35 = arith.constant 0 : index
      %69 = vector.load %arg9[%c0_34, %c0_35] : memref<8x1024xf32, #tpu.memory_space<vmem>>, vector<8x1024xf32>
      tpu.vector_store %arg9[%c0_34, %c0_35], %68 {strides = array<i32>} : memref<8x1024xf32, #tpu.memory_space<vmem>>, vector<8x1024xf32>,
      %c0_36 = arith.constant 0 : index
      %c0_37 = arith.constant 0 : index
      %70 = vector.load %arg10[%c0_36, %c0_37] : memref<8x1024xf32, #tpu.memory_space<vmem>>, vector<8x1024xf32>
      %71 = arith.addf %70, %60 : vector<8x1024xf32>
      %c0_38 = arith.constant 0 : index
      %c0_39 = arith.constant 0 : index
      %72 = vector.load %arg10[%c0_38, %c0_39] : memref<8x1024xf32, #tpu.memory_space<vmem>>, vector<8x1024xf32>
      tpu.vector_store %arg10[%c0_38, %c0_39], %71 {strides = array<i32>} : memref<8x1024xf32, #tpu.memory_space<vmem>>, vector<8x1024xf32>,
    } else {
    }
    %c0_i32_3 = arith.constant 0 : i32
    %8 = arith.cmpi eq, %arg1, %c0_i32_3 : i32
    %9 = arith.extui %8 : i1 to i32
    %c0_i32_4 = arith.constant 0 : i32
    %10 = arith.cmpi ne, %9, %c0_i32_4 : i32
    scf.if %10 {
      %c0 = arith.constant 0 : index
      %c0_5 = arith.constant 0 : index
      %11 = vector.load %arg7[%c0, %c0_5] : memref<8x1024xf32, #tpu.memory_space<vmem>>, vector<8x1024xf32>
      %12 = vector.shape_cast %11 : vector<8x1024xf32> to vector<1x8x1024xf32>
      %cst = arith.constant dense<0.000000e+00> : vector<1xf32>
      %13 = vector.multi_reduction <add>, %12, %cst [1, 2] : vector<1x8x1024xf32> to vector<1xf32>
      %14 = vector.shape_cast %13 : vector<1xf32> to vector<1x1x1xf32>
      %15 = vector.extract %14[0, 0, 0] : f32 from vector<1x1x1xf32>
      %c0_6 = arith.constant 0 : index
      %c0_7 = arith.constant 0 : index
      %16 = memref.load %arg6[%c0_6, %c0_7] : memref<1x4xf32, #tpu.memory_space<smem>>
      memref.store %15, %arg6[%c0_6, %c0_7] : memref<1x4xf32, #tpu.memory_space<smem>>
      %c0_8 = arith.constant 0 : index
      %c0_9 = arith.constant 0 : index
      %17 = vector.load %arg8[%c0_8, %c0_9] : memref<8x1024xf32, #tpu.memory_space<vmem>>, vector<8x1024xf32>
      %18 = vector.shape_cast %17 : vector<8x1024xf32> to vector<1x8x1024xf32>
      %cst_10 = arith.constant dense<0.000000e+00> : vector<1xf32>
      %19 = vector.multi_reduction <add>, %18, %cst_10 [1, 2] : vector<1x8x1024xf32> to vector<1xf32>
      %20 = vector.shape_cast %19 : vector<1xf32> to vector<1x1x1xf32>
      %21 = vector.extract %20[0, 0, 0] : f32 from vector<1x1x1xf32>
      %c0_11 = arith.constant 0 : index
      %c1 = arith.constant 1 : index
      %22 = memref.load %arg6[%c0_11, %c1] : memref<1x4xf32, #tpu.memory_space<smem>>
      memref.store %21, %arg6[%c0_11, %c1] : memref<1x4xf32, #tpu.memory_space<smem>>
      %c0_12 = arith.constant 0 : index
      %c0_13 = arith.constant 0 : index
      %23 = vector.load %arg9[%c0_12, %c0_13] : memref<8x1024xf32, #tpu.memory_space<vmem>>, vector<8x1024xf32>
      %24 = vector.shape_cast %23 : vector<8x1024xf32> to vector<1x8x1024xf32>
      %cst_14 = arith.constant dense<0.000000e+00> : vector<1xf32>
      %25 = vector.multi_reduction <add>, %24, %cst_14 [1, 2] : vector<1x8x1024xf32> to vector<1xf32>
      %26 = vector.shape_cast %25 : vector<1xf32> to vector<1x1x1xf32>
      %27 = vector.extract %26[0, 0, 0] : f32 from vector<1x1x1xf32>
      %c0_15 = arith.constant 0 : index
      %c2 = arith.constant 2 : index
      %28 = memref.load %arg6[%c0_15, %c2] : memref<1x4xf32, #tpu.memory_space<smem>>
      memref.store %27, %arg6[%c0_15, %c2] : memref<1x4xf32, #tpu.memory_space<smem>>
      %c0_16 = arith.constant 0 : index
      %c0_17 = arith.constant 0 : index
      %29 = vector.load %arg10[%c0_16, %c0_17] : memref<8x1024xf32, #tpu.memory_space<vmem>>, vector<8x1024xf32>
      %30 = vector.shape_cast %29 : vector<8x1024xf32> to vector<1x8x1024xf32>
      %cst_18 = arith.constant dense<0.000000e+00> : vector<1xf32>
      %31 = vector.multi_reduction <add>, %30, %cst_18 [1, 2] : vector<1x8x1024xf32> to vector<1xf32>
      %32 = vector.shape_cast %31 : vector<1xf32> to vector<1x1x1xf32>
      %33 = vector.extract %32[0, 0, 0] : f32 from vector<1x1x1xf32>
      %c0_19 = arith.constant 0 : index
      %c3 = arith.constant 3 : index
      %34 = memref.load %arg6[%c0_19, %c3] : memref<1x4xf32, #tpu.memory_space<smem>>
      memref.store %33, %arg6[%c0_19, %c3] : memref<1x4xf32, #tpu.memory_space<smem>>
    } else {
    }
    return
  }
  func.func @transform_0(%arg0: i32, %arg1: i32) -> (i32, i32) {
    %c1_i32 = arith.constant 1 : i32
    %0 = arith.muli %arg0, %c1_i32 : i32
    %1 = arith.addi %0, %arg1 : i32
    %c0_i32 = arith.constant 0 : i32
    %c0_i32_0 = arith.constant 0 : i32
    return %1, %c0_i32 : i32, i32
  }
  func.func @transform_1(%arg0: i32, %arg1: i32) -> (i32, i32) {
    %c1_i32 = arith.constant 1 : i32
    %0 = arith.muli %arg0, %c1_i32 : i32
    %1 = arith.addi %0, %arg1 : i32
    %c0_i32 = arith.constant 0 : i32
    %c0_i32_0 = arith.constant 0 : i32
    return %1, %c0_i32 : i32, i32
  }
  func.func @transform_2(%arg0: i32, %arg1: i32) -> (i32, i32) {
    %c1_i32 = arith.constant 1 : i32
    %0 = arith.muli %arg0, %c1_i32 : i32
    %1 = arith.addi %0, %arg1 : i32
    %c0_i32 = arith.constant 0 : i32
    %c0_i32_0 = arith.constant 0 : i32
    return %1, %c0_i32 : i32, i32
  }
  func.func @transform_3(%arg0: i32, %arg1: i32) -> (i32, i32) {
    %c1_i32 = arith.constant 1 : i32
    %0 = arith.muli %arg0, %c1_i32 : i32
    %1 = arith.addi %0, %arg1 : i32
    %c0_i32 = arith.constant 0 : i32
    %c0_i32_0 = arith.constant 0 : i32
    return %1, %c0_i32 : i32, i32
  }
  func.func @transform_4(%arg0: i32, %arg1: i32) -> (i32, i32) {
    %c0_i32 = arith.constant 0 : i32
    %c0_i32_0 = arith.constant 0 : i32
    return %arg0, %c0_i32 : i32, i32
  }
}

</mosaic_0001>

<llo_original>
// kernel: tpu_custom_call.1
$region0: #{tpu_custom_call.1}
  #allocation0 [shape = 'u32[]', space=smem, size = 0x4, offset = 0x4, fixed_abs, tag = 'smem constant byte address 0x4 - core index']
  #allocation1 [shape = 'u32[144,128]{1,0:T(1,128)}', space=vmem, size = 0x12000, scoped, tag = 'internal scratch']
  #allocation2 [shape = 'f32[8,1024]{1,0:T(8,128)}', space=vmem, size = 0x8000, scoped, tag = 'scratch operand']
  #allocation3 [shape = 'f32[8,1024]{1,0:T(8,128)}', space=vmem, size = 0x8000, scoped, tag = 'scratch operand']
  #allocation4 [shape = 'f32[8,1024]{1,0:T(8,128)}', space=vmem, size = 0x8000, scoped, tag = 'scratch operand']
  #allocation5 [shape = 'f32[8,1024]{1,0:T(8,128)}', space=vmem, size = 0x8000, scoped, tag = 'scratch operand']
  %s0 = inlined_call_operand.hbm [shape: f32[1,1024], index: 0, kind: input, shape index: {}]
  %s1 = inlined_call_operand.hbm [shape: f32[1,1024], index: 1, kind: input, shape index: {}]
  %s2 = inlined_call_operand.hbm [shape: f32[1,1024], index: 2, kind: input, shape index: {}]
  %s3 = inlined_call_operand.hbm [shape: f32[1,1024], index: 3, kind: input, shape index: {}]
  %s4 = inlined_call_operand.hbm [shape: f32[1,4], index: 4, kind: output, shape index: {}]
  %s5 = sld [smem:[#allocation0]]
  $region54: #{tpu_custom_call.1} parent=0
    _
  %s7 = ssub.s32 1, %s5
  %s8 = scalar_select 0, %s7, %s5
  $region1: #{tpu_custom_call.1} parent=0
    #allocation6 [shape = 'u8[32768]{0}', space=vmem, size = 0x8000, scoped, tag = 'input window, operand 0, single buffered']
    #allocation7 [shape = 's32[1]{0}', space=sflag, size = 0x4, scoped, tag = 'scoped memory for tpu_custom_call.1']
    #allocation8 [shape = 's32[1]{0}', space=sflag, size = 0x4, scoped, tag = 'scoped memory for tpu_custom_call.1']
    #allocation9 [shape = 'u8[32768]{0}', space=vmem, size = 0x8000, scoped, tag = 'input window, operand 1, single buffered']
    #allocation10 [shape = 's32[1]{0}', space=sflag, size = 0x4, scoped, tag = 'scoped memory for tpu_custom_call.1']
    #allocation11 [shape = 'u8[32768]{0}', space=vmem, size = 0x8000, scoped, tag = 'input window, operand 2, single buffered']
    #allocation12 [shape = 'u8[32768]{0}', space=vmem, size = 0x8000, scoped, tag = 'input window, operand 3, single buffered']
    #allocation13 [shape = 's32[1]{0}', space=sflag, size = 0x4, scoped, tag = 'scoped memory for tpu_custom_call.1']
    #allocation14 [shape = 'u8[512]{0}', space=smem, size = 0x200, scoped, tag = 'output window, operand 0, single buffered']
    %9 = vsyncpa [#allocation7], 0
    %10 = vsyncpa [#allocation10], 0
    %11 = vsyncpa [#allocation13], 0
    %12 = vsyncpa [#allocation8], 0
    // Predicated region
    $region2: #{tpu_custom_call.1} parent=1 // pred_check
      _
    $region3: #{tpu_custom_call.1} parent=1 // pred_check_branch
      %14 = sbr.rel (0) target = $region5
    $region4: #{tpu_custom_call.1} parent=1 // pred_region
      %s15 = sadd.s32 0, 0
      %s16 = smul.u32 8, %s15
      %s17 = ssub.s32 1, %s16
      %s18 = smul.u32 16, %s17
      %s19 = smul.u32 %s18, 8
      %s21 = ssub.s32 1024, %s19
      %22 = vsyncadd [#allocation7], %s21
      %p23 = scmp.ne.s32.totalorder 0, %s19
      %s24 = smul.addr %s16, 8
      %s25 = smul.addr %s24, 16
      %s26 = scalar_lea.hbm %s0, %s25
      %s27 = smul.u32 8, %s17
      %s28 = sshll.u32 [#allocation6], 4
      %s29 = int_to_ptr.vmem [resolvable:$true] %s28
      %s30 = sshll.u32 %s27, 4
      %34 = dma.hbm_to_vmem [thread:$0]  (%p23), %s26, %s30, %s29, [#allocation7], 128, 128, 8
    $region5: #{tpu_custom_call.1} parent=1 // pred_fallthru
      _
    // Predicated region
    $region6: #{tpu_custom_call.1} parent=1 // pred_check
      _
    $region7: #{tpu_custom_call.1} parent=1 // pred_check_branch
      %36 = sbr.rel (0) target = $region9
    $region8: #{tpu_custom_call.1} parent=1 // pred_region
      %s37 = sadd.s32 0, 0
      %s38 = smul.u32 8, %s37
      %s39 = ssub.s32 1, %s38
      %s40 = smul.u32 16, %s39
      %s41 = smul.u32 %s40, 8
      %s43 = ssub.s32 1024, %s41
      %44 = vsyncadd [#allocation10], %s43
      %p45 = scmp.ne.s32.totalorder 0, %s41
      %s46 = smul.addr %s38, 8
      %s47 = smul.addr %s46, 16
      %s48 = scalar_lea.hbm %s1, %s47
      %s49 = smul.u32 8, %s39
      %s50 = sshll.u32 [#allocation9], 4
      %s51 = int_to_ptr.vmem [resolvable:$true] %s50
      %s52 = sshll.u32 %s49, 4
      %56 = dma.hbm_to_vmem [thread:$0]  (%p45), %s48, %s52, %s51, [#allocation10], 128, 128, 8
    $region9: #{tpu_custom_call.1} parent=1 // pred_fallthru
      _
    // Predicated region
    $region10: #{tpu_custom_call.1} parent=1 // pred_check
      _
    $region11: #{tpu_custom_call.1} parent=1 // pred_check_branch
      %58 = sbr.rel (0) target = $region13
    $region12: #{tpu_custom_call.1} parent=1 // pred_region
      %s59 = sadd.s32 0, 0
      %s60 = smul.u32 8, %s59
      %s61 = ssub.s32 1, %s60
      %s62 = smul.u32 16, %s61
      %s63 = smul.u32 %s62, 8
      %s65 = ssub.s32 1024, %s63
      %66 = vsyncadd [#allocation10], %s65
      %p67 = scmp.ne.s32.totalorder 0, %s63
      %s68 = smul.addr %s60, 8
      %s69 = smul.addr %s68, 16
      %s70 = scalar_lea.hbm %s2, %s69
      %s71 = smul.u32 8, %s61
      %s72 = sshll.u32 [#allocation11], 4
      %s73 = int_to_ptr.vmem [resolvable:$true] %s72
      %s74 = sshll.u32 %s71, 4
      %78 = dma.hbm_to_vmem [thread:$0]  (%p67), %s70, %s74, %s73, [#allocation10], 128, 128, 8
    $region13: #{tpu_custom_call.1} parent=1 // pred_fallthru
      _
    // Predicated region
    $region14: #{tpu_custom_call.1} parent=1 // pred_check
      _
    $region15: #{tpu_custom_call.1} parent=1 // pred_check_branch
      %80 = sbr.rel (0) target = $region17
    $region16: #{tpu_custom_call.1} parent=1 // pred_region
      %s81 = sadd.s32 0, 0
      %s82 = smul.u32 8, %s81
      %s83 = ssub.s32 1, %s82
      %s84 = smul.u32 16, %s83
      %s85 = smul.u32 %s84, 8
      %s87 = ssub.s32 1024, %s85
      %88 = vsyncadd [#allocation13], %s87
      %p89 = scmp.ne.s32.totalorder 0, %s85
      %s90 = smul.addr %s82, 8
      %s91 = smul.addr %s90, 16
      %s92 = scalar_lea.hbm %s3, %s91
      %s93 = smul.u32 8, %s83
      %s94 = sshll.u32 [#allocation12], 4
      %s95 = int_to_ptr.vmem [resolvable:$true] %s94
      %s96 = sshll.u32 %s93, 4
      %100 = dma.hbm_to_vmem [thread:$0]  (%p89), %s92, %s96, %s95, [#allocation13], 128, 128, 8
    $region17: #{tpu_custom_call.1} parent=1 // pred_fallthru
      _
    // Predicated region
    $region18: #{tpu_custom_call.1} parent=1 // pred_check
      _
    $region19: #{tpu_custom_call.1} parent=1 // pred_check_branch
      %102 = sbr.rel (0) target = $region21
    $region20: #{tpu_custom_call.1} parent=1 // pred_region
      %103 = dma.done [#allocation7], 1024
    $region21: #{tpu_custom_call.1} parent=1 // pred_fallthru
      _
    // Predicated region
    $region22: #{tpu_custom_call.1} parent=1 // pred_check
      _
    $region23: #{tpu_custom_call.1} parent=1 // pred_check_branch
      %105 = sbr.rel (0) target = $region25
    $region24: #{tpu_custom_call.1} parent=1 // pred_region
      %106 = dma.done [#allocation10], 1024
    $region25: #{tpu_custom_call.1} parent=1 // pred_fallthru
      _
    // Predicated region
    $region26: #{tpu_custom_call.1} parent=1 // pred_check
      _
    $region27: #{tpu_custom_call.1} parent=1 // pred_check_branch
      %108 = sbr.rel (0) target = $region29
    $region28: #{tpu_custom_call.1} parent=1 // pred_region
      %109 = dma.done [#allocation10], 1024
    $region29: #{tpu_custom_call.1} parent=1 // pred_fallthru
      _
    // Predicated region
    $region30: #{tpu_custom_call.1} parent=1 // pred_check
      _
    $region31: #{tpu_custom_call.1} parent=1 // pred_check_branch
      %111 = sbr.rel (0) target = $region33
    $region32: #{tpu_custom_call.1} parent=1 // pred_region
      %112 = dma.done [#allocation13], 1024
    $region33: #{tpu_custom_call.1} parent=1 // pred_fallthru
      _
    %s113 = sadd.s32 0, 0
    %s114 = smul.u32 8, %s113
    %s115 = ssub.s32 1, %s114
    %s116 = smul.u32 16, %s115
    %s117 = smul.u32 %s116, 8
    %s118 = sadd.s32 0, 0
    %s119 = smul.u32 8, %s118
    %s120 = ssub.s32 1, %s119
    %s121 = smul.u32 16, %s120
    %s122 = smul.u32 %s121, 8
    %s123 = sadd.s32 0, 0
    %s124 = smul.u32 8, %s123
    %s125 = ssub.s32 1, %s124
    %s126 = smul.u32 16, %s125
    %s127 = smul.u32 %s126, 8
    %s128 = sadd.s32 0, 0
    %s129 = smul.u32 8, %s128
    %s130 = ssub.s32 1, %s129
    %s131 = smul.u32 16, %s130
    %s132 = smul.u32 %s131, 8
    %s133 = sadd.s32 0, 0
    %p134 = scmp.eq.s32.totalorder 0, 0
    // Predicated region
    $region34: #{tpu_custom_call.1} parent=1 // pred_check
      %p135 = pneg %p134
    $region35: #{tpu_custom_call.1} parent=1 // pred_check_branch
      %137 = sbr.rel (%p135) target = $region37
    $region36: #{tpu_custom_call.1} parent=1 // pred_region
      %138 = vst [vmem:[#allocation2] sm:$0xff] 0.0
      %139 = vst [vmem:[#allocation2 + $0x8] sm:$0xff] 0.0
      %140 = vst [vmem:[#allocation2 + $0x10] sm:$0xff] 0.0
      %141 = vst [vmem:[#allocation2 + $0x18] sm:$0xff] 0.0
      %142 = vst [vmem:[#allocation2 + $0x20] sm:$0xff] 0.0
      %143 = vst [vmem:[#allocation2 + $0x28] sm:$0xff] 0.0
      %144 = vst [vmem:[#allocation2 + $0x30] sm:$0xff] 0.0
      %145 = vst [vmem:[#allocation2 + $0x38] sm:$0xff] 0.0
      %146 = vst [vmem:[#allocation3] sm:$0xff] 0.0
      %147 = vst [vmem:[#allocation3 + $0x8] sm:$0xff] 0.0
      %148 = vst [vmem:[#allocation3 + $0x10] sm:$0xff] 0.0
      %149 = vst [vmem:[#allocation3 + $0x18] sm:$0xff] 0.0
      %150 = vst [vmem:[#allocation3 + $0x20] sm:$0xff] 0.0
      %151 = vst [vmem:[#allocation3 + $0x28] sm:$0xff] 0.0
      %152 = vst [vmem:[#allocation3 + $0x30] sm:$0xff] 0.0
      %153 = vst [vmem:[#allocation3 + $0x38] sm:$0xff] 0.0
      %154 = vst [vmem:[#allocation4] sm:$0xff] 0.0
      %155 = vst [vmem:[#allocation4 + $0x8] sm:$0xff] 0.0
      %156 = vst [vmem:[#allocation4 + $0x10] sm:$0xff] 0.0
      %157 = vst [vmem:[#allocation4 + $0x18] sm:$0xff] 0.0
      %158 = vst [vmem:[#allocation4 + $0x20] sm:$0xff] 0.0
      %159 = vst [vmem:[#allocation4 + $0x28] sm:$0xff] 0.0
      %160 = vst [vmem:[#allocation4 + $0x30] sm:$0xff] 0.0
      %161 = vst [vmem:[#allocation4 + $0x38] sm:$0xff] 0.0
      %162 = vst [vmem:[#allocation5] sm:$0xff] 0.0
      %163 = vst [vmem:[#allocation5 + $0x8] sm:$0xff] 0.0
      %164 = vst [vmem:[#allocation5 + $0x10] sm:$0xff] 0.0
      %165 = vst [vmem:[#allocation5 + $0x18] sm:$0xff] 0.0
      %166 = vst [vmem:[#allocation5 + $0x20] sm:$0xff] 0.0
      %167 = vst [vmem:[#allocation5 + $0x28] sm:$0xff] 0.0
      %168 = vst [vmem:[#allocation5 + $0x30] sm:$0xff] 0.0
      %169 = vst [vmem:[#allocation5 + $0x38] sm:$0xff] 0.0
    $region37: #{tpu_custom_call.1} parent=1 // pred_fallthru
      _
    %p170 = scmp.eq.s32.totalorder %s133, 0
    // Predicated region
    $region38: #{tpu_custom_call.1} parent=1 // pred_check
      %p171 = pneg %p170
    $region39: #{tpu_custom_call.1} parent=1 // pred_check_branch
      %173 = sbr.rel (%p171) target = $region41
    $region40: #{tpu_custom_call.1} parent=1 // pred_region
      %v174 = vld [vmem:[#allocation6] sm:$0xff]
      %v175 = vld [vmem:[#allocation6 + $0x8] sm:$0xff]
      %v176 = vld [vmem:[#allocation6 + $0x10] sm:$0xff]
      %v177 = vld [vmem:[#allocation6 + $0x18] sm:$0xff]
      %v178 = vld [vmem:[#allocation6 + $0x20] sm:$0xff]
      %v179 = vld [vmem:[#allocation6 + $0x28] sm:$0xff]
      %v180 = vld [vmem:[#allocation6 + $0x30] sm:$0xff]
      %v181 = vld [vmem:[#allocation6 + $0x38] sm:$0xff]
      %v182 = vld [vmem:[#allocation9] sm:$0xff]
      %v183 = vld [vmem:[#allocation9 + $0x8] sm:$0xff]
      %v184 = vld [vmem:[#allocation9 + $0x10] sm:$0xff]
      %v185 = vld [vmem:[#allocation9 + $0x18] sm:$0xff]
      %v186 = vld [vmem:[#allocation9 + $0x20] sm:$0xff]
      %v187 = vld [vmem:[#allocation9 + $0x28] sm:$0xff]
      %v188 = vld [vmem:[#allocation9 + $0x30] sm:$0xff]
      %v189 = vld [vmem:[#allocation9 + $0x38] sm:$0xff]
      %v190 = vld [vmem:[#allocation11] sm:$0xff]
      %v191 = vld [vmem:[#allocation11 + $0x8] sm:$0xff]
      %v192 = vld [vmem:[#allocation11 + $0x10] sm:$0xff]
      %v193 = vld [vmem:[#allocation11 + $0x18] sm:$0xff]
      %v194 = vld [vmem:[#allocation11 + $0x20] sm:$0xff]
      %v195 = vld [vmem:[#allocation11 + $0x28] sm:$0xff]
      %v196 = vld [vmem:[#allocation11 + $0x30] sm:$0xff]
      %v197 = vld [vmem:[#allocation11 + $0x38] sm:$0xff]
      %v198 = vld [vmem:[#allocation12] sm:$0xff]
      %v199 = vld [vmem:[#allocation12 + $0x8] sm:$0xff]
      %v200 = vld [vmem:[#allocation12 + $0x10] sm:$0xff]
      %v201 = vld [vmem:[#allocation12 + $0x18] sm:$0xff]
      %v202 = vld [vmem:[#allocation12 + $0x20] sm:$0xff]
      %v203 = vld [vmem:[#allocation12 + $0x28] sm:$0xff]
      %v204 = vld [vmem:[#allocation12 + $0x30] sm:$0xff]
      %v205 = vld [vmem:[#allocation12 + $0x38] sm:$0xff]
      %v206 = vadd.f32 %v174, 1e-08
      %v207 = vadd.f32 %v175, 1e-08
      %v208 = vadd.f32 %v176, 1e-08
      %v209 = vadd.f32 %v177, 1e-08
      %v210 = vadd.f32 %v178, 1e-08
      %v211 = vadd.f32 %v179, 1e-08
      %v212 = vadd.f32 %v180, 1e-08
      %v213 = vadd.f32 %v181, 1e-08
      %v214 = vlog2.pop %v206
      %v215 = vmul.f32 %v214, 0.6931472
      %v216 = vlog2.pop %v207
      %v217 = vmul.f32 %v216, 0.6931472
      %v218 = vlog2.pop %v208
      %v219 = vmul.f32 %v218, 0.6931472
      %v220 = vlog2.pop %v209
      %v221 = vmul.f32 %v220, 0.6931472
      %v222 = vlog2.pop %v210
      %v223 = vmul.f32 %v222, 0.6931472
      %v224 = vlog2.pop %v211
      %v225 = vmul.f32 %v224, 0.6931472
      %v226 = vlog2.pop %v212
      %v227 = vmul.f32 %v226, 0.6931472
      %v228 = vlog2.pop %v213
      %v229 = vmul.f32 %v228, 0.6931472
      %vm230 = vcmp.gt.f32.partialorder %v182, 0.0
      %vm231 = vcmp.gt.f32.partialorder %v183, 0.0
      %vm232 = vcmp.gt.f32.partialorder %v184, 0.0
      %vm233 = vcmp.gt.f32.partialorder %v185, 0.0
      %vm234 = vcmp.gt.f32.partialorder %v186, 0.0
      %vm235 = vcmp.gt.f32.partialorder %v187, 0.0
      %vm236 = vcmp.gt.f32.partialorder %v188, 0.0
      %vm237 = vcmp.gt.f32.partialorder %v189, 0.0
      %v238 = vlog2.pop %v182
      %v239 = vmul.f32 %v238, 0.6931472
      %v240 = vlog2.pop %v183
      %v241 = vmul.f32 %v240, 0.6931472
      %v242 = vlog2.pop %v184
      %v243 = vmul.f32 %v242, 0.6931472
      %v244 = vlog2.pop %v185
      %v245 = vmul.f32 %v244, 0.6931472
      %v246 = vlog2.pop %v186
      %v247 = vmul.f32 %v246, 0.6931472
      %v248 = vlog2.pop %v187
      %v249 = vmul.f32 %v248, 0.6931472
      %v250 = vlog2.pop %v188
      %v251 = vmul.f32 %v250, 0.6931472
      %v252 = vlog2.pop %v189
      %v253 = vmul.f32 %v252, 0.6931472
      %v254 = vsub.f32 %v239, %v215
      %v255 = vsub.f32 %v241, %v217
      %v256 = vsub.f32 %v243, %v219
      %v257 = vsub.f32 %v245, %v221
      %v258 = vsub.f32 %v247, %v223
      %v259 = vsub.f32 %v249, %v225
      %v260 = vsub.f32 %v251, %v227
      %v261 = vsub.f32 %v253, %v229
      %v262 = vmul.f32 %v182, %v254
      %v263 = vmul.f32 %v183, %v255
      %v264 = vmul.f32 %v184, %v256
      %v265 = vmul.f32 %v185, %v257
      %v266 = vmul.f32 %v186, %v258
      %v267 = vmul.f32 %v187, %v259
      %v268 = vmul.f32 %v188, %v260
      %v269 = vmul.f32 %v189, %v261
      %v270 = vsel %vm230, %v262, 0.0
      %v271 = vsel %vm231, %v263, 0.0
      %v272 = vsel %vm232, %v264, 0.0
      %v273 = vsel %vm233, %v265, 0.0
      %v274 = vsel %vm234, %v266, 0.0
      %v275 = vsel %vm235, %v267, 0.0
      %v276 = vsel %vm236, %v268, 0.0
      %v277 = vsel %vm237, %v269, 0.0
      %v278 = vand.u32 2147483647, %v190
      %v279 = vand.u32 2147483647, %v191
      %v280 = vand.u32 2147483647, %v192
      %v281 = vand.u32 2147483647, %v193
      %v282 = vand.u32 2147483647, %v194
      %v283 = vand.u32 2147483647, %v195
      %v284 = vand.u32 2147483647, %v196
      %v285 = vand.u32 2147483647, %v197
      %v286 = vsub.f32 0.0, %v278
      %v287 = vsub.f32 0.0, %v279
      %v288 = vsub.f32 0.0, %v280
      %v289 = vsub.f32 0.0, %v281
      %v290 = vsub.f32 0.0, %v282
      %v291 = vsub.f32 0.0, %v283
      %v292 = vsub.f32 0.0, %v284
      %v293 = vsub.f32 0.0, %v285
      %v294 = vmul.f32 %v286, 1.442695
      %v295 = vpow.pop %v294
      %v296 = vmul.f32 %v287, 1.442695
      %v297 = vpow.pop %v296
      %v298 = vmul.f32 %v288, 1.442695
      %v299 = vpow.pop %v298
      %v300 = vmul.f32 %v289, 1.442695
      %v301 = vpow.pop %v300
      %v302 = vmul.f32 %v290, 1.442695
      %v303 = vpow.pop %v302
      %v304 = vmul.f32 %v291, 1.442695
      %v305 = vpow.pop %v304
      %v306 = vmul.f32 %v292, 1.442695
      %v307 = vpow.pop %v306
      %v308 = vmul.f32 %v293, 1.442695
      %v309 = vpow.pop %v308
      %v310 = vmax.f32 %v190, 0.0
      %v311 = vmax.f32 %v191, 0.0
      %v312 = vmax.f32 %v192, 0.0
      %v313 = vmax.f32 %v193, 0.0
      %v314 = vmax.f32 %v194, 0.0
      %v315 = vmax.f32 %v195, 0.0
      %v316 = vmax.f32 %v196, 0.0
      %v317 = vmax.f32 %v197, 0.0
      %v318 = vmul.f32 %v190, %v198
      %v319 = vmul.f32 %v191, %v199
      %v320 = vmul.f32 %v192, %v200
      %v321 = vmul.f32 %v193, %v201
      %v322 = vmul.f32 %v194, %v202
      %v323 = vmul.f32 %v195, %v203
      %v324 = vmul.f32 %v196, %v204
      %v325 = vmul.f32 %v197, %v205
      %v326 = vsub.f32 %v310, %v318
      %v327 = vsub.f32 %v311, %v319
      %v328 = vsub.f32 %v312, %v320
      %v329 = vsub.f32 %v313, %v321
      %v330 = vsub.f32 %v314, %v322
      %v331 = vsub.f32 %v315, %v323
      %v332 = vsub.f32 %v316, %v324
      %v333 = vsub.f32 %v317, %v325
      %v334 = vadd.f32 %v295, 1.0
      %v335 = vlog2.pop %v334
      %v336 = vmul.f32 %v335, 0.6931472
      %v337 = vmul.f32 -0.5, %v295
      %v338 = vadd.f32 %v337, 1.0
      %v339 = vmul.f32 %v338, %v295
      %v340 = vand.u32 2147483647, %v295
      %vm341 = vcmp.lt.f32.partialorder %v340, 0.0004427343
      %v342 = vsel %vm341, %v339, %v336
      %v343 = vadd.f32 %v297, 1.0
      %v344 = vlog2.pop %v343
      %v345 = vmul.f32 %v344, 0.6931472
      %v346 = vmul.f32 -0.5, %v297
      %v347 = vadd.f32 %v346, 1.0
      %v348 = vmul.f32 %v347, %v297
      %v349 = vand.u32 2147483647, %v297
      %vm350 = vcmp.lt.f32.partialorder %v349, 0.0004427343
      %v351 = vsel %vm350, %v348, %v345
      %v352 = vadd.f32 %v299, 1.0
      %v353 = vlog2.pop %v352
      %v354 = vmul.f32 %v353, 0.6931472
      %v355 = vmul.f32 -0.5, %v299
      %v356 = vadd.f32 %v355, 1.0
      %v357 = vmul.f32 %v356, %v299
      %v358 = vand.u32 2147483647, %v299
      %vm359 = vcmp.lt.f32.partialorder %v358, 0.0004427343
      %v360 = vsel %vm359, %v357, %v354
      %v361 = vadd.f32 %v301, 1.0
      %v362 = vlog2.pop %v361
      %v363 = vmul.f32 %v362, 0.6931472
      %v364 = vmul.f32 -0.5, %v301
      %v365 = vadd.f32 %v364, 1.0
      %v366 = vmul.f32 %v365, %v301
      %v367 = vand.u32 2147483647, %v301
      %vm368 = vcmp.lt.f32.partialorder %v367, 0.0004427343
      %v369 = vsel %vm368, %v366, %v363
      %v370 = vadd.f32 %v303, 1.0
      %v371 = vlog2.pop %v370
      %v372 = vmul.f32 %v371, 0.6931472
      %v373 = vmul.f32 -0.5, %v303
      %v374 = vadd.f32 %v373, 1.0
      %v375 = vmul.f32 %v374, %v303
      %v376 = vand.u32 2147483647, %v303
      %vm377 = vcmp.lt.f32.partialorder %v376, 0.0004427343
      %v378 = vsel %vm377, %v375, %v372
      %v379 = vadd.f32 %v305, 1.0
      %v380 = vlog2.pop %v379
      %v381 = vmul.f32 %v380, 0.6931472
      %v382 = vmul.f32 -0.5, %v305
      %v383 = vadd.f32 %v382, 1.0
      %v384 = vmul.f32 %v383, %v305
      %v385 = vand.u32 2147483647, %v305
      %vm386 = vcmp.lt.f32.partialorder %v385, 0.0004427343
      %v387 = vsel %vm386, %v384, %v381
      %v388 = vadd.f32 %v307, 1.0
      %v389 = vlog2.pop %v388
      %v390 = vmul.f32 %v389, 0.6931472
      %v391 = vmul.f32 -0.5, %v307
      %v392 = vadd.f32 %v391, 1.0
      %v393 = vmul.f32 %v392, %v307
      %v394 = vand.u32 2147483647, %v307
      %vm395 = vcmp.lt.f32.partialorder %v394, 0.0004427343
      %v396 = vsel %vm395, %v393, %v390
      %v397 = vadd.f32 %v309, 1.0
      %v398 = vlog2.pop %v397
      %v399 = vmul.f32 %v398, 0.6931472
      %v400 = vmul.f32 -0.5, %v309
      %v401 = vadd.f32 %v400, 1.0
      %v402 = vmul.f32 %v401, %v309
      %v403 = vand.u32 2147483647, %v309
      %vm404 = vcmp.lt.f32.partialorder %v403, 0.0004427343
      %v405 = vsel %vm404, %v402, %v399
      %v406 = vadd.f32 %v326, %v342
      %v407 = vadd.f32 %v327, %v351
      %v408 = vadd.f32 %v328, %v360
      %v409 = vadd.f32 %v329, %v369
      %v410 = vadd.f32 %v330, %v378
      %v411 = vadd.f32 %v331, %v387
      %v412 = vadd.f32 %v332, %v396
      %v413 = vadd.f32 %v333, %v405
      %v414 = vadd.f32 %v295, 1.0
      %v415 = vadd.f32 %v297, 1.0
      %v416 = vadd.f32 %v299, 1.0
      %v417 = vadd.f32 %v301, 1.0
      %v418 = vadd.f32 %v303, 1.0
      %v419 = vadd.f32 %v305, 1.0
      %v420 = vadd.f32 %v307, 1.0
      %v421 = vadd.f32 %v309, 1.0
      %v422 = vrcp.pop %v414
      %v423 = vmul.f32 1.0, %v422
      %v424 = vrcp.pop %v415
      %v425 = vmul.f32 1.0, %v424
      %v426 = vrcp.pop %v416
      %v427 = vmul.f32 1.0, %v426
      %v428 = vrcp.pop %v417
      %v429 = vmul.f32 1.0, %v428
      %v430 = vrcp.pop %v418
      %v431 = vmul.f32 1.0, %v430
      %v432 = vrcp.pop %v419
      %v433 = vmul.f32 1.0, %v432
      %v434 = vrcp.pop %v420
      %v435 = vmul.f32 1.0, %v434
      %v436 = vrcp.pop %v421
      %v437 = vmul.f32 1.0, %v436
      %vm438 = vcmp.ge.f32.partialorder %v190, 0.0
      %vm439 = vcmp.ge.f32.partialorder %v191, 0.0
      %vm440 = vcmp.ge.f32.partialorder %v192, 0.0
      %vm441 = vcmp.ge.f32.partialorder %v193, 0.0
      %vm442 = vcmp.ge.f32.partialorder %v194, 0.0
      %vm443 = vcmp.ge.f32.partialorder %v195, 0.0
      %vm444 = vcmp.ge.f32.partialorder %v196, 0.0
      %vm445 = vcmp.ge.f32.partialorder %v197, 0.0
      %v446 = vsub.f32 1.0, %v423
      %v447 = vsub.f32 1.0, %v425
      %v448 = vsub.f32 1.0, %v427
      %v449 = vsub.f32 1.0, %v429
      %v450 = vsub.f32 1.0, %v431
      %v451 = vsub.f32 1.0, %v433
      %v452 = vsub.f32 1.0, %v435
      %v453 = vsub.f32 1.0, %v437
      %v454 = vsel %vm438, %v423, %v446
      %v455 = vsel %vm439, %v425, %v447
      %v456 = vsel %vm440, %v427, %v448
      %v457 = vsel %vm441, %v429, %v449
      %v458 = vsel %vm442, %v431, %v450
      %v459 = vsel %vm443, %v433, %v451
      %v460 = vsel %vm444, %v435, %v452
      %v461 = vsel %vm445, %v437, %v453
      %v462 = vmul.f32 %v454, %v198
      %v463 = vmul.f32 %v455, %v199
      %v464 = vmul.f32 %v456, %v200
      %v465 = vmul.f32 %v457, %v201
      %v466 = vmul.f32 %v458, %v202
      %v467 = vmul.f32 %v459, %v203
      %v468 = vmul.f32 %v460, %v204
      %v469 = vmul.f32 %v461, %v205
      %v470 = vadd.f32 %v454, %v198
      %v471 = vadd.f32 %v455, %v199
      %v472 = vadd.f32 %v456, %v200
      %v473 = vadd.f32 %v457, %v201
      %v474 = vadd.f32 %v458, %v202
      %v475 = vadd.f32 %v459, %v203
      %v476 = vadd.f32 %v460, %v204
      %v477 = vadd.f32 %v461, %v205
      %v478 = vlaneseq
      %v479 = vshrl.u32 %v478, 7
      %v480 = vmul.u32 %v479, 1024
      %v481 = vlaneseq
      %v482 = vand.u32 %v481, 127
      %v483 = vadd.s32 %v482, 128
      %v484 = vadd.s32 %v482, 256
      %v485 = vadd.s32 %v482, 384
      %v486 = vadd.s32 %v482, 512
      %v487 = vadd.s32 %v482, 640
      %v488 = vadd.s32 %v482, 768
      %v489 = vadd.s32 %v482, 896
      %v490 = vadd.s32 %v480, %v482
      %v491 = vadd.s32 %v480, %v483
      %v492 = vadd.s32 %v480, %v484
      %v493 = vadd.s32 %v480, %v485
      %v494 = vadd.s32 %v480, %v486
      %v495 = vadd.s32 %v480, %v487
      %v496 = vadd.s32 %v480, %v488
      %v497 = vadd.s32 %v480, %v489
      %vm498 = vcmp.lt.s32.totalorder %v490, 512
      %vm499 = vcmp.lt.s32.totalorder %v491, 512
      %vm500 = vcmp.lt.s32.totalorder %v492, 512
      %vm501 = vcmp.lt.s32.totalorder %v493, 512
      %vm502 = vcmp.lt.s32.totalorder %v494, 512
      %vm503 = vcmp.lt.s32.totalorder %v495, 512
      %vm504 = vcmp.lt.s32.totalorder %v496, 512
      %vm505 = vcmp.lt.s32.totalorder %v497, 512
      %v514 = vcombine.low %v270, %v271
      %v515 = vcombine.high %v270, %v271
      %v516 = vcombine.low %v272, %v273
      %v517 = vcombine.high %v272, %v273
      %v518 = vcombine.low %v274, %v275
      %v519 = vcombine.high %v274, %v275
      %v520 = vcombine.low %v276, %v277
      %v521 = vcombine.high %v276, %v277
      %v523 = vunpack.c.l.s4 1966171168
      %v524 = vunpack.c.0.s8 %v523
      %v525 = vlaneseq
      %v526 = vshrl.u32 %v525, 7
      %v527 = vsub.s32 %v524, %v526
      %v528 = vrot.slane %v514, %v527
      %v530 = vunpack.c.l.s4 1966171168
      %v531 = vunpack.c.0.s8 %v530
      %v532 = vlaneseq
      %v533 = vshrl.u32 %v532, 7
      %v534 = vsub.s32 %v531, %v533
      %v535 = vrot.slane %v515, %v534
      %v537 = vunpack.c.l.s4 1966171168
      %v538 = vunpack.c.0.s8 %v537
      %v539 = vlaneseq
      %v540 = vshrl.u32 %v539, 7
      %v541 = vsub.s32 %v538, %v540
      %v542 = vrot.slane %v516, %v541
      %v544 = vunpack.c.l.s4 1966171168
      %v545 = vunpack.c.0.s8 %v544
      %v546 = vlaneseq
      %v547 = vshrl.u32 %v546, 7
      %v548 = vsub.s32 %v545, %v547
      %v549 = vrot.slane %v517, %v548
      %v551 = vunpack.c.l.s4 1966171168
      %v552 = vunpack.c.0.s8 %v551
      %v553 = vlaneseq
      %v554 = vshrl.u32 %v553, 7
      %v555 = vsub.s32 %v552, %v554
      %v556 = vrot.slane %v518, %v555
      %v558 = vunpack.c.l.s4 1966171168
      %v559 = vunpack.c.0.s8 %v558
      %v560 = vlaneseq
      %v561 = vshrl.u32 %v560, 7
      %v562 = vsub.s32 %v559, %v561
      %v563 = vrot.slane %v519, %v562
      %v565 = vunpack.c.l.s4 1966171168
      %v566 = vunpack.c.0.s8 %v565
      %v567 = vlaneseq
      %v568 = vshrl.u32 %v567, 7
      %v569 = vsub.s32 %v566, %v568
      %v570 = vrot.slane %v520, %v569
      %v572 = vunpack.c.l.s4 1966171168
      %v573 = vunpack.c.0.s8 %v572
      %v574 = vlaneseq
      %v575 = vshrl.u32 %v574, 7
      %v576 = vsub.s32 %v573, %v575
      %v577 = vrot.slane %v521, %v576
      %v578 = vcombine.low %v528, %v542
      %v579 = vcombine.high %v528, %v542
      %v580 = vcombine.low %v535, %v549
      %v581 = vcombine.high %v535, %v549
      %v582 = vcombine.low %v556, %v570
      %v583 = vcombine.high %v556, %v570
      %v584 = vcombine.low %v563, %v577
      %v585 = vcombine.high %v563, %v577
      %v587 = vunpack.c.l.s4 1966171168
      %v588 = vunpack.c.0.s8 %v587
      %v589 = vlaneseq
      %v590 = vshrl.u32 %v589, 7
      %v591 = vsub.s32 %v588, %v590
      %v592 = vrot.slane %v578, %v591
      %v594 = vunpack.c.l.s4 1966171168
      %v595 = vunpack.c.0.s8 %v594
      %v596 = vlaneseq
      %v597 = vshrl.u32 %v596, 7
      %v598 = vsub.s32 %v595, %v597
      %v599 = vrot.slane %v580, %v598
      %v601 = vunpack.c.l.s4 1966171168
      %v602 = vunpack.c.0.s8 %v601
      %v603 = vlaneseq
      %v604 = vshrl.u32 %v603, 7
      %v605 = vsub.s32 %v602, %v604
      %v606 = vrot.slane %v579, %v605
      %v608 = vunpack.c.l.s4 1966171168
      %v609 = vunpack.c.0.s8 %v608
      %v610 = vlaneseq
      %v611 = vshrl.u32 %v610, 7
      %v612 = vsub.s32 %v609, %v611
      %v613 = vrot.slane %v581, %v612
      %v615 = vunpack.c.l.s4 1966171168
      %v616 = vunpack.c.0.s8 %v615
      %v617 = vlaneseq
      %v618 = vshrl.u32 %v617, 7
      %v619 = vsub.s32 %v616, %v618
      %v620 = vrot.slane %v582, %v619
      %v622 = vunpack.c.l.s4 1966171168
      %v623 = vunpack.c.0.s8 %v622
      %v624 = vlaneseq
      %v625 = vshrl.u32 %v624, 7
      %v626 = vsub.s32 %v623, %v625
      %v627 = vrot.slane %v584, %v626
      %v629 = vunpack.c.l.s4 1966171168
      %v630 = vunpack.c.0.s8 %v629
      %v631 = vlaneseq
      %v632 = vshrl.u32 %v631, 7
      %v633 = vsub.s32 %v630, %v632
      %v634 = vrot.slane %v583, %v633
      %v636 = vunpack.c.l.s4 1966171168
      %v637 = vunpack.c.0.s8 %v636
      %v638 = vlaneseq
      %v639 = vshrl.u32 %v638, 7
      %v640 = vsub.s32 %v637, %v639
      %v641 = vrot.slane %v585, %v640
      %v642 = vcombine.low %v592, %v620
      %v643 = vcombine.high %v592, %v620
      %v644 = vcombine.low %v599, %v627
      %v645 = vcombine.high %v599, %v627
      %v646 = vcombine.low %v606, %v634
      %v647 = vcombine.high %v606, %v634
      %v648 = vcombine.low %v613, %v641
      %v649 = vcombine.high %v613, %v641
      %v658 = vsel %vm498, %v642, 0.0
      %v659 = vsel %vm499, %v646, 0.0
      %v660 = vsel %vm500, %v643, 0.0
      %v661 = vsel %vm501, %v647, 0.0
      %v662 = vsel %vm502, %v644, 0.0
      %v663 = vsel %vm503, %v648, 0.0
      %v664 = vsel %vm504, %v645, 0.0
      %v665 = vsel %vm505, %v649, 0.0
      %v674 = vcombine.low %v406, %v407
      %v675 = vcombine.high %v406, %v407
      %v676 = vcombine.low %v408, %v409
      %v677 = vcombine.high %v408, %v409
      %v678 = vcombine.low %v410, %v411
      %v679 = vcombine.high %v410, %v411
      %v680 = vcombine.low %v412, %v413
      %v681 = vcombine.high %v412, %v413
      %v683 = vunpack.c.l.s4 1966171168
      %v684 = vunpack.c.0.s8 %v683
      %v685 = vlaneseq
      %v686 = vshrl.u32 %v685, 7
      %v687 = vsub.s32 %v684, %v686
      %v688 = vrot.slane %v674, %v687
      %v690 = vunpack.c.l.s4 1966171168
      %v691 = vunpack.c.0.s8 %v690
      %v692 = vlaneseq
      %v693 = vshrl.u32 %v692, 7
      %v694 = vsub.s32 %v691, %v693
      %v695 = vrot.slane %v675, %v694
      %v697 = vunpack.c.l.s4 1966171168
      %v698 = vunpack.c.0.s8 %v697
      %v699 = vlaneseq
      %v700 = vshrl.u32 %v699, 7
      %v701 = vsub.s32 %v698, %v700
      %v702 = vrot.slane %v676, %v701
      %v704 = vunpack.c.l.s4 1966171168
      %v705 = vunpack.c.0.s8 %v704
      %v706 = vlaneseq
      %v707 = vshrl.u32 %v706, 7
      %v708 = vsub.s32 %v705, %v707
      %v709 = vrot.slane %v677, %v708
      %v711 = vunpack.c.l.s4 1966171168
      %v712 = vunpack.c.0.s8 %v711
      %v713 = vlaneseq
      %v714 = vshrl.u32 %v713, 7
      %v715 = vsub.s32 %v712, %v714
      %v716 = vrot.slane %v678, %v715
      %v718 = vunpack.c.l.s4 1966171168
      %v719 = vunpack.c.0.s8 %v718
      %v720 = vlaneseq
      %v721 = vshrl.u32 %v720, 7
      %v722 = vsub.s32 %v719, %v721
      %v723 = vrot.slane %v679, %v722
      %v725 = vunpack.c.l.s4 1966171168
      %v726 = vunpack.c.0.s8 %v725
      %v727 = vlaneseq
      %v728 = vshrl.u32 %v727, 7
      %v729 = vsub.s32 %v726, %v728
      %v730 = vrot.slane %v680, %v729
      %v732 = vunpack.c.l.s4 1966171168
      %v733 = vunpack.c.0.s8 %v732
      %v734 = vlaneseq
      %v735 = vshrl.u32 %v734, 7
      %v736 = vsub.s32 %v733, %v735
      %v737 = vrot.slane %v681, %v736
      %v738 = vcombine.low %v688, %v702
      %v739 = vcombine.high %v688, %v702
      %v740 = vcombine.low %v695, %v709
      %v741 = vcombine.high %v695, %v709
      %v742 = vcombine.low %v716, %v730
      %v743 = vcombine.high %v716, %v730
      %v744 = vcombine.low %v723, %v737
      %v745 = vcombine.high %v723, %v737
      %v747 = vunpack.c.l.s4 1966171168
      %v748 = vunpack.c.0.s8 %v747
      %v749 = vlaneseq
      %v750 = vshrl.u32 %v749, 7
      %v751 = vsub.s32 %v748, %v750
      %v752 = vrot.slane %v738, %v751
      %v754 = vunpack.c.l.s4 1966171168
      %v755 = vunpack.c.0.s8 %v754
      %v756 = vlaneseq
      %v757 = vshrl.u32 %v756, 7
      %v758 = vsub.s32 %v755, %v757
      %v759 = vrot.slane %v740, %v758
      %v761 = vunpack.c.l.s4 1966171168
      %v762 = vunpack.c.0.s8 %v761
      %v763 = vlaneseq
      %v764 = vshrl.u32 %v763, 7
      %v765 = vsub.s32 %v762, %v764
      %v766 = vrot.slane %v739, %v765
      %v768 = vunpack.c.l.s4 1966171168
      %v769 = vunpack.c.0.s8 %v768
      %v770 = vlaneseq
      %v771 = vshrl.u32 %v770, 7
      %v772 = vsub.s32 %v769, %v771
      %v773 = vrot.slane %v741, %v772
      %v775 = vunpack.c.l.s4 1966171168
      %v776 = vunpack.c.0.s8 %v775
      %v777 = vlaneseq
      %v778 = vshrl.u32 %v777, 7
      %v779 = vsub.s32 %v776, %v778
      %v780 = vrot.slane %v742, %v779
      %v782 = vunpack.c.l.s4 1966171168
      %v783 = vunpack.c.0.s8 %v782
      %v784 = vlaneseq
      %v785 = vshrl.u32 %v784, 7
      %v786 = vsub.s32 %v783, %v785
      %v787 = vrot.slane %v744, %v786
      %v789 = vunpack.c.l.s4 1966171168
      %v790 = vunpack.c.0.s8 %v789
      %v791 = vlaneseq
      %v792 = vshrl.u32 %v791, 7
      %v793 = vsub.s32 %v790, %v792
      %v794 = vrot.slane %v743, %v793
      %v796 = vunpack.c.l.s4 1966171168
      %v797 = vunpack.c.0.s8 %v796
      %v798 = vlaneseq
      %v799 = vshrl.u32 %v798, 7
      %v800 = vsub.s32 %v797, %v799
      %v801 = vrot.slane %v745, %v800
      %v802 = vcombine.low %v752, %v780
      %v803 = vcombine.high %v752, %v780
      %v804 = vcombine.low %v759, %v787
      %v805 = vcombine.high %v759, %v787
      %v806 = vcombine.low %v766, %v794
      %v807 = vcombine.high %v766, %v794
      %v808 = vcombine.low %v773, %v801
      %v809 = vcombine.high %v773, %v801
      %v818 = vsel %vm498, %v802, 0.0
      %v819 = vsel %vm499, %v806, 0.0
      %v820 = vsel %vm500, %v803, 0.0
      %v821 = vsel %vm501, %v807, 0.0
      %v822 = vsel %vm502, %v804, 0.0
      %v823 = vsel %vm503, %v808, 0.0
      %v824 = vsel %vm504, %v805, 0.0
      %v825 = vsel %vm505, %v809, 0.0
      %v834 = vcombine.low %v462, %v463
      %v835 = vcombine.high %v462, %v463
      %v836 = vcombine.low %v464, %v465
      %v837 = vcombine.high %v464, %v465
      %v838 = vcombine.low %v466, %v467
      %v839 = vcombine.high %v466, %v467
      %v840 = vcombine.low %v468, %v469
      %v841 = vcombine.high %v468, %v469
      %v843 = vunpack.c.l.s4 1966171168
      %v844 = vunpack.c.0.s8 %v843
      %v845 = vlaneseq
      %v846 = vshrl.u32 %v845, 7
      %v847 = vsub.s32 %v844, %v846
      %v848 = vrot.slane %v834, %v847
      %v850 = vunpack.c.l.s4 1966171168
      %v851 = vunpack.c.0.s8 %v850
      %v852 = vlaneseq
      %v853 = vshrl.u32 %v852, 7
      %v854 = vsub.s32 %v851, %v853
      %v855 = vrot.slane %v835, %v854
      %v857 = vunpack.c.l.s4 1966171168
      %v858 = vunpack.c.0.s8 %v857
      %v859 = vlaneseq
      %v860 = vshrl.u32 %v859, 7
      %v861 = vsub.s32 %v858, %v860
      %v862 = vrot.slane %v836, %v861
      %v864 = vunpack.c.l.s4 1966171168
      %v865 = vunpack.c.0.s8 %v864
      %v866 = vlaneseq
      %v867 = vshrl.u32 %v866, 7
      %v868 = vsub.s32 %v865, %v867
      %v869 = vrot.slane %v837, %v868
      %v871 = vunpack.c.l.s4 1966171168
      %v872 = vunpack.c.0.s8 %v871
      %v873 = vlaneseq
      %v874 = vshrl.u32 %v873, 7
      %v875 = vsub.s32 %v872, %v874
      %v876 = vrot.slane %v838, %v875
      %v878 = vunpack.c.l.s4 1966171168
      %v879 = vunpack.c.0.s8 %v878
      %v880 = vlaneseq
      %v881 = vshrl.u32 %v880, 7
      %v882 = vsub.s32 %v879, %v881
      %v883 = vrot.slane %v839, %v882
      %v885 = vunpack.c.l.s4 1966171168
      %v886 = vunpack.c.0.s8 %v885
      %v887 = vlaneseq
      %v888 = vshrl.u32 %v887, 7
      %v889 = vsub.s32 %v886, %v888
      %v890 = vrot.slane %v840, %v889
      %v892 = vunpack.c.l.s4 1966171168
      %v893 = vunpack.c.0.s8 %v892
      %v894 = vlaneseq
      %v895 = vshrl.u32 %v894, 7
      %v896 = vsub.s32 %v893, %v895
      %v897 = vrot.slane %v841, %v896
      %v898 = vcombine.low %v848, %v862
      %v899 = vcombine.high %v848, %v862
      %v900 = vcombine.low %v855, %v869
      %v901 = vcombine.high %v855, %v869
      %v902 = vcombine.low %v876, %v890
      %v903 = vcombine.high %v876, %v890
      %v904 = vcombine.low %v883, %v897
      %v905 = vcombine.high %v883, %v897
      %v907 = vunpack.c.l.s4 1966171168
      %v908 = vunpack.c.0.s8 %v907
      %v909 = vlaneseq
      %v910 = vshrl.u32 %v909, 7
      %v911 = vsub.s32 %v908, %v910
      %v912 = vrot.slane %v898, %v911
      %v914 = vunpack.c.l.s4 1966171168
      %v915 = vunpack.c.0.s8 %v914
      %v916 = vlaneseq
      %v917 = vshrl.u32 %v916, 7
      %v918 = vsub.s32 %v915, %v917
      %v919 = vrot.slane %v900, %v918
      %v921 = vunpack.c.l.s4 1966171168
      %v922 = vunpack.c.0.s8 %v921
      %v923 = vlaneseq
      %v924 = vshrl.u32 %v923, 7
      %v925 = vsub.s32 %v922, %v924
      %v926 = vrot.slane %v899, %v925
      %v928 = vunpack.c.l.s4 1966171168
      %v929 = vunpack.c.0.s8 %v928
      %v930 = vlaneseq
      %v931 = vshrl.u32 %v930, 7
      %v932 = vsub.s32 %v929, %v931
      %v933 = vrot.slane %v901, %v932
      %v935 = vunpack.c.l.s4 1966171168
      %v936 = vunpack.c.0.s8 %v935
      %v937 = vlaneseq
      %v938 = vshrl.u32 %v937, 7
      %v939 = vsub.s32 %v936, %v938
      %v940 = vrot.slane %v902, %v939
      %v942 = vunpack.c.l.s4 1966171168
      %v943 = vunpack.c.0.s8 %v942
      %v944 = vlaneseq
      %v945 = vshrl.u32 %v944, 7
      %v946 = vsub.s32 %v943, %v945
      %v947 = vrot.slane %v904, %v946
      %v949 = vunpack.c.l.s4 1966171168
      %v950 = vunpack.c.0.s8 %v949
      %v951 = vlaneseq
      %v952 = vshrl.u32 %v951, 7
      %v953 = vsub.s32 %v950, %v952
      %v954 = vrot.slane %v903, %v953
      %v956 = vunpack.c.l.s4 1966171168
      %v957 = vunpack.c.0.s8 %v956
      %v958 = vlaneseq
      %v959 = vshrl.u32 %v958, 7
      %v960 = vsub.s32 %v957, %v959
      %v961 = vrot.slane %v905, %v960
      %v962 = vcombine.low %v912, %v940
      %v963 = vcombine.high %v912, %v940
      %v964 = vcombine.low %v919, %v947
      %v965 = vcombine.high %v919, %v947
      %v966 = vcombine.low %v926, %v954
      %v967 = vcombine.high %v926, %v954
      %v968 = vcombine.low %v933, %v961
      %v969 = vcombine.high %v933, %v961
      %v978 = vsel %vm498, %v962, 0.0
      %v979 = vsel %vm499, %v966, 0.0
      %v980 = vsel %vm500, %v963, 0.0
      %v981 = vsel %vm501, %v967, 0.0
      %v982 = vsel %vm502, %v964, 0.0
      %v983 = vsel %vm503, %v968, 0.0
      %v984 = vsel %vm504, %v965, 0.0
      %v985 = vsel %vm505, %v969, 0.0
      %v994 = vcombine.low %v470, %v471
      %v995 = vcombine.high %v470, %v471
      %v996 = vcombine.low %v472, %v473
      %v997 = vcombine.high %v472, %v473
      %v998 = vcombine.low %v474, %v475
      %v999 = vcombine.high %v474, %v475
      %v1000 = vcombine.low %v476, %v477
      %v1001 = vcombine.high %v476, %v477
      %v1003 = vunpack.c.l.s4 1966171168
      %v1004 = vunpack.c.0.s8 %v1003
      %v1005 = vlaneseq
      %v1006 = vshrl.u32 %v1005, 7
      %v1007 = vsub.s32 %v1004, %v1006
      %v1008 = vrot.slane %v994, %v1007
      %v1010 = vunpack.c.l.s4 1966171168
      %v1011 = vunpack.c.0.s8 %v1010
      %v1012 = vlaneseq
      %v1013 = vshrl.u32 %v1012, 7
      %v1014 = vsub.s32 %v1011, %v1013
      %v1015 = vrot.slane %v995, %v1014
      %v1017 = vunpack.c.l.s4 1966171168
      %v1018 = vunpack.c.0.s8 %v1017
      %v1019 = vlaneseq
      %v1020 = vshrl.u32 %v1019, 7
      %v1021 = vsub.s32 %v1018, %v1020
      %v1022 = vrot.slane %v996, %v1021
      %v1024 = vunpack.c.l.s4 1966171168
      %v1025 = vunpack.c.0.s8 %v1024
      %v1026 = vlaneseq
      %v1027 = vshrl.u32 %v1026, 7
      %v1028 = vsub.s32 %v1025, %v1027
      %v1029 = vrot.slane %v997, %v1028
      %v1031 = vunpack.c.l.s4 1966171168
      %v1032 = vunpack.c.0.s8 %v1031
      %v1033 = vlaneseq
      %v1034 = vshrl.u32 %v1033, 7
      %v1035 = vsub.s32 %v1032, %v1034
      %v1036 = vrot.slane %v998, %v1035
      %v1038 = vunpack.c.l.s4 1966171168
      %v1039 = vunpack.c.0.s8 %v1038
      %v1040 = vlaneseq
      %v1041 = vshrl.u32 %v1040, 7
      %v1042 = vsub.s32 %v1039, %v1041
      %v1043 = vrot.slane %v999, %v1042
      %v1045 = vunpack.c.l.s4 1966171168
      %v1046 = vunpack.c.0.s8 %v1045
      %v1047 = vlaneseq
      %v1048 = vshrl.u32 %v1047, 7
      %v1049 = vsub.s32 %v1046, %v1048
      %v1050 = vrot.slane %v1000, %v1049
      %v1052 = vunpack.c.l.s4 1966171168
      %v1053 = vunpack.c.0.s8 %v1052
      %v1054 = vlaneseq
      %v1055 = vshrl.u32 %v1054, 7
      %v1056 = vsub.s32 %v1053, %v1055
      %v1057 = vrot.slane %v1001, %v1056
      %v1058 = vcombine.low %v1008, %v1022
      %v1059 = vcombine.high %v1008, %v1022
      %v1060 = vcombine.low %v1015, %v1029
      %v1061 = vcombine.high %v1015, %v1029
      %v1062 = vcombine.low %v1036, %v1050
      %v1063 = vcombine.high %v1036, %v1050
      %v1064 = vcombine.low %v1043, %v1057
      %v1065 = vcombine.high %v1043, %v1057
      %v1067 = vunpack.c.l.s4 1966171168
      %v1068 = vunpack.c.0.s8 %v1067
      %v1069 = vlaneseq
      %v1070 = vshrl.u32 %v1069, 7
      %v1071 = vsub.s32 %v1068, %v1070
      %v1072 = vrot.slane %v1058, %v1071
      %v1074 = vunpack.c.l.s4 1966171168
      %v1075 = vunpack.c.0.s8 %v1074
      %v1076 = vlaneseq
      %v1077 = vshrl.u32 %v1076, 7
      %v1078 = vsub.s32 %v1075, %v1077
      %v1079 = vrot.slane %v1060, %v1078
      %v1081 = vunpack.c.l.s4 1966171168
      %v1082 = vunpack.c.0.s8 %v1081
      %v1083 = vlaneseq
      %v1084 = vshrl.u32 %v1083, 7
      %v1085 = vsub.s32 %v1082, %v1084
      %v1086 = vrot.slane %v1059, %v1085
      %v1088 = vunpack.c.l.s4 1966171168
      %v1089 = vunpack.c.0.s8 %v1088
      %v1090 = vlaneseq
      %v1091 = vshrl.u32 %v1090, 7
      %v1092 = vsub.s32 %v1089, %v1091
      %v1093 = vrot.slane %v1061, %v1092
      %v1095 = vunpack.c.l.s4 1966171168
      %v1096 = vunpack.c.0.s8 %v1095
      %v1097 = vlaneseq
      %v1098 = vshrl.u32 %v1097, 7
      %v1099 = vsub.s32 %v1096, %v1098
      %v1100 = vrot.slane %v1062, %v1099
      %v1102 = vunpack.c.l.s4 1966171168
      %v1103 = vunpack.c.0.s8 %v1102
      %v1104 = vlaneseq
      %v1105 = vshrl.u32 %v1104, 7
      %v1106 = vsub.s32 %v1103, %v1105
      %v1107 = vrot.slane %v1064, %v1106
      %v1109 = vunpack.c.l.s4 1966171168
      %v1110 = vunpack.c.0.s8 %v1109
      %v1111 = vlaneseq
      %v1112 = vshrl.u32 %v1111, 7
      %v1113 = vsub.s32 %v1110, %v1112
      %v1114 = vrot.slane %v1063, %v1113
      %v1116 = vunpack.c.l.s4 1966171168
      %v1117 = vunpack.c.0.s8 %v1116
      %v1118 = vlaneseq
      %v1119 = vshrl.u32 %v1118, 7
      %v1120 = vsub.s32 %v1117, %v1119
      %v1121 = vrot.slane %v1065, %v1120
      %v1122 = vcombine.low %v1072, %v1100
      %v1123 = vcombine.high %v1072, %v1100
      %v1124 = vcombine.low %v1079, %v1107
      %v1125 = vcombine.high %v1079, %v1107
      %v1126 = vcombine.low %v1086, %v1114
      %v1127 = vcombine.high %v1086, %v1114
      %v1128 = vcombine.low %v1093, %v1121
      %v1129 = vcombine.high %v1093, %v1121
      %v1138 = vsel %vm498, %v1122, 0.0
      %v1139 = vsel %vm499, %v1126, 0.0
      %v1140 = vsel %vm500, %v1123, 0.0
      %v1141 = vsel %vm501, %v1127, 0.0
      %v1142 = vsel %vm502, %v1124, 0.0
      %v1143 = vsel %vm503, %v1128, 0.0
      %v1144 = vsel %vm504, %v1125, 0.0
      %v1145 = vsel %vm505, %v1129, 0.0
      %v1146 = vld [vmem:[#allocation2] sm:$0xff]
      %v1147 = vld [vmem:[#allocation2 + $0x8] sm:$0xff]
      %v1148 = vld [vmem:[#allocation2 + $0x10] sm:$0xff]
      %v1149 = vld [vmem:[#allocation2 + $0x18] sm:$0xff]
      %v1150 = vld [vmem:[#allocation2 + $0x20] sm:$0xff]
      %v1151 = vld [vmem:[#allocation2 + $0x28] sm:$0xff]
      %v1152 = vld [vmem:[#allocation2 + $0x30] sm:$0xff]
      %v1153 = vld [vmem:[#allocation2 + $0x38] sm:$0xff]
      %v1154 = vadd.f32 %v1146, %v658
      %v1155 = vadd.f32 %v1147, %v659
      %v1156 = vadd.f32 %v1148, %v660
      %v1157 = vadd.f32 %v1149, %v661
      %v1158 = vadd.f32 %v1150, %v662
      %v1159 = vadd.f32 %v1151, %v663
      %v1160 = vadd.f32 %v1152, %v664
      %v1161 = vadd.f32 %v1153, %v665
      %1162 = vst [vmem:[#allocation2] sm:$0xff] %v1154
      %1163 = vst [vmem:[#allocation2 + $0x8] sm:$0xff] %v1155
      %1164 = vst [vmem:[#allocation2 + $0x10] sm:$0xff] %v1156
      %1165 = vst [vmem:[#allocation2 + $0x18] sm:$0xff] %v1157
      %1166 = vst [vmem:[#allocation2 + $0x20] sm:$0xff] %v1158
      %1167 = vst [vmem:[#allocation2 + $0x28] sm:$0xff] %v1159
      %1168 = vst [vmem:[#allocation2 + $0x30] sm:$0xff] %v1160
      %1169 = vst [vmem:[#allocation2 + $0x38] sm:$0xff] %v1161
      %v1170 = vld [vmem:[#allocation3] sm:$0xff]
      %v1171 = vld [vmem:[#allocation3 + $0x8] sm:$0xff]
      %v1172 = vld [vmem:[#allocation3 + $0x10] sm:$0xff]
      %v1173 = vld [vmem:[#allocation3 + $0x18] sm:$0xff]
      %v1174 = vld [vmem:[#allocation3 + $0x20] sm:$0xff]
      %v1175 = vld [vmem:[#allocation3 + $0x28] sm:$0xff]
      %v1176 = vld [vmem:[#allocation3 + $0x30] sm:$0xff]
      %v1177 = vld [vmem:[#allocation3 + $0x38] sm:$0xff]
      %v1178 = vadd.f32 %v1170, %v818
      %v1179 = vadd.f32 %v1171, %v819
      %v1180 = vadd.f32 %v1172, %v820
      %v1181 = vadd.f32 %v1173, %v821
      %v1182 = vadd.f32 %v1174, %v822
      %v1183 = vadd.f32 %v1175, %v823
      %v1184 = vadd.f32 %v1176, %v824
      %v1185 = vadd.f32 %v1177, %v825
      %1186 = vst [vmem:[#allocation3] sm:$0xff] %v1178
      %1187 = vst [vmem:[#allocation3 + $0x8] sm:$0xff] %v1179
      %1188 = vst [vmem:[#allocation3 + $0x10] sm:$0xff] %v1180
      %1189 = vst [vmem:[#allocation3 + $0x18] sm:$0xff] %v1181
      %1190 = vst [vmem:[#allocation3 + $0x20] sm:$0xff] %v1182
      %1191 = vst [vmem:[#allocation3 + $0x28] sm:$0xff] %v1183
      %1192 = vst [vmem:[#allocation3 + $0x30] sm:$0xff] %v1184
      %1193 = vst [vmem:[#allocation3 + $0x38] sm:$0xff] %v1185
      %v1194 = vld [vmem:[#allocation4] sm:$0xff]
      %v1195 = vld [vmem:[#allocation4 + $0x8] sm:$0xff]
      %v1196 = vld [vmem:[#allocation4 + $0x10] sm:$0xff]
      %v1197 = vld [vmem:[#allocation4 + $0x18] sm:$0xff]
      %v1198 = vld [vmem:[#allocation4 + $0x20] sm:$0xff]
      %v1199 = vld [vmem:[#allocation4 + $0x28] sm:$0xff]
      %v1200 = vld [vmem:[#allocation4 + $0x30] sm:$0xff]
      %v1201 = vld [vmem:[#allocation4 + $0x38] sm:$0xff]
      %v1202 = vadd.f32 %v1194, %v978
      %v1203 = vadd.f32 %v1195, %v979
      %v1204 = vadd.f32 %v1196, %v980
      %v1205 = vadd.f32 %v1197, %v981
      %v1206 = vadd.f32 %v1198, %v982
      %v1207 = vadd.f32 %v1199, %v983
      %v1208 = vadd.f32 %v1200, %v984
      %v1209 = vadd.f32 %v1201, %v985
      %1210 = vst [vmem:[#allocation4] sm:$0xff] %v1202
      %1211 = vst [vmem:[#allocation4 + $0x8] sm:$0xff] %v1203
      %1212 = vst [vmem:[#allocation4 + $0x10] sm:$0xff] %v1204
      %1213 = vst [vmem:[#allocation4 + $0x18] sm:$0xff] %v1205
      %1214 = vst [vmem:[#allocation4 + $0x20] sm:$0xff] %v1206
      %1215 = vst [vmem:[#allocation4 + $0x28] sm:$0xff] %v1207
      %1216 = vst [vmem:[#allocation4 + $0x30] sm:$0xff] %v1208
      %1217 = vst [vmem:[#allocation4 + $0x38] sm:$0xff] %v1209
      %v1218 = vld [vmem:[#allocation5] sm:$0xff]
      %v1219 = vld [vmem:[#allocation5 + $0x8] sm:$0xff]
      %v1220 = vld [vmem:[#allocation5 + $0x10] sm:$0xff]
      %v1221 = vld [vmem:[#allocation5 + $0x18] sm:$0xff]
      %v1222 = vld [vmem:[#allocation5 + $0x20] sm:$0xff]
      %v1223 = vld [vmem:[#allocation5 + $0x28] sm:$0xff]
      %v1224 = vld [vmem:[#allocation5 + $0x30] sm:$0xff]
      %v1225 = vld [vmem:[#allocation5 + $0x38] sm:$0xff]
      %v1226 = vadd.f32 %v1218, %v1138
      %v1227 = vadd.f32 %v1219, %v1139
      %v1228 = vadd.f32 %v1220, %v1140
      %v1229 = vadd.f32 %v1221, %v1141
      %v1230 = vadd.f32 %v1222, %v1142
      %v1231 = vadd.f32 %v1223, %v1143
      %v1232 = vadd.f32 %v1224, %v1144
      %v1233 = vadd.f32 %v1225, %v1145
      %1234 = vst [vmem:[#allocation5] sm:$0xff] %v1226
      %1235 = vst [vmem:[#allocation5 + $0x8] sm:$0xff] %v1227
      %1236 = vst [vmem:[#allocation5 + $0x10] sm:$0xff] %v1228
      %1237 = vst [vmem:[#allocation5 + $0x18] sm:$0xff] %v1229
      %1238 = vst [vmem:[#allocation5 + $0x20] sm:$0xff] %v1230
      %1239 = vst [vmem:[#allocation5 + $0x28] sm:$0xff] %v1231
      %1240 = vst [vmem:[#allocation5 + $0x30] sm:$0xff] %v1232
      %1241 = vst [vmem:[#allocation5 + $0x38] sm:$0xff] %v1233
    $region41: #{tpu_custom_call.1} parent=1 // pred_fallthru
      _
    // Predicated region
    $region42: #{tpu_custom_call.1} parent=1 // pred_check
      %p1242 = pneg %p134
    $region43: #{tpu_custom_call.1} parent=1 // pred_check_branch
      %1244 = sbr.rel (%p1242) target = $region45
    $region44: #{tpu_custom_call.1} parent=1 // pred_region
      %v1245 = vld [vmem:[#allocation2] sm:$0xff]
      %v1246 = vld [vmem:[#allocation2 + $0x8] sm:$0xff]
      %v1247 = vld [vmem:[#allocation2 + $0x10] sm:$0xff]
      %v1248 = vld [vmem:[#allocation2 + $0x18] sm:$0xff]
      %v1249 = vld [vmem:[#allocation2 + $0x20] sm:$0xff]
      %v1250 = vld [vmem:[#allocation2 + $0x28] sm:$0xff]
      %v1251 = vld [vmem:[#allocation2 + $0x30] sm:$0xff]
      %v1252 = vld [vmem:[#allocation2 + $0x38] sm:$0xff]
      %v1253 = vadd.f32 %v1245, %v1246
      %v1254 = vadd.f32 %v1253, %v1247
      %v1255 = vadd.f32 %v1254, %v1248
      %v1256 = vadd.f32 %v1255, %v1249
      %v1257 = vadd.f32 %v1256, %v1250
      %v1258 = vadd.f32 %v1257, %v1251
      %v1259 = vadd.f32 %v1258, %v1252
      %1260 = vadd.xlane.f32.xlu0 %v1259
      %v1261 = vpop.xlane.xlu0 %1260
      %v1262 = vrot.slane %v1261, 4
      %v1263 = vadd.f32 %v1261, %v1262
      %v1264 = vrot.slane %v1263, 2
      %v1265 = vadd.f32 %v1263, %v1264
      %v1266 = vrot.slane %v1265, 1
      %v1267 = vadd.f32 %v1265, %v1266
      %s1268 = vtos %v1267
      %s1269 = scalar_lea.smem [#allocation14], 0
      %1270 = sst [smem:[%s1269]] %s1268
      %v1271 = vld [vmem:[#allocation3] sm:$0xff]
      %v1272 = vld [vmem:[#allocation3 + $0x8] sm:$0xff]
      %v1273 = vld [vmem:[#allocation3 + $0x10] sm:$0xff]
      %v1274 = vld [vmem:[#allocation3 + $0x18] sm:$0xff]
      %v1275 = vld [vmem:[#allocation3 + $0x20] sm:$0xff]
      %v1276 = vld [vmem:[#allocation3 + $0x28] sm:$0xff]
      %v1277 = vld [vmem:[#allocation3 + $0x30] sm:$0xff]
      %v1278 = vld [vmem:[#allocation3 + $0x38] sm:$0xff]
      %v1279 = vadd.f32 %v1271, %v1272
      %v1280 = vadd.f32 %v1279, %v1273
      %v1281 = vadd.f32 %v1280, %v1274
      %v1282 = vadd.f32 %v1281, %v1275
      %v1283 = vadd.f32 %v1282, %v1276
      %v1284 = vadd.f32 %v1283, %v1277
      %v1285 = vadd.f32 %v1284, %v1278
      %1286 = vadd.xlane.f32.xlu0 %v1285
      %v1287 = vpop.xlane.xlu0 %1286
      %v1288 = vrot.slane %v1287, 4
      %v1289 = vadd.f32 %v1287, %v1288
      %v1290 = vrot.slane %v1289, 2
      %v1291 = vadd.f32 %v1289, %v1290
      %v1292 = vrot.slane %v1291, 1
      %v1293 = vadd.f32 %v1291, %v1292
      %s1294 = vtos %v1293
      %s1295 = scalar_lea.smem [#allocation14], 1
      %1296 = sst [smem:[%s1295]] %s1294
      %v1297 = vld [vmem:[#allocation4] sm:$0xff]
      %v1298 = vld [vmem:[#allocation4 + $0x8] sm:$0xff]
      %v1299 = vld [vmem:[#allocation4 + $0x10] sm:$0xff]
      %v1300 = vld [vmem:[#allocation4 + $0x18] sm:$0xff]
      %v1301 = vld [vmem:[#allocation4 + $0x20] sm:$0xff]
      %v1302 = vld [vmem:[#allocation4 + $0x28] sm:$0xff]
      %v1303 = vld [vmem:[#allocation4 + $0x30] sm:$0xff]
      %v1304 = vld [vmem:[#allocation4 + $0x38] sm:$0xff]
      %v1305 = vadd.f32 %v1297, %v1298
      %v1306 = vadd.f32 %v1305, %v1299
      %v1307 = vadd.f32 %v1306, %v1300
      %v1308 = vadd.f32 %v1307, %v1301
      %v1309 = vadd.f32 %v1308, %v1302
      %v1310 = vadd.f32 %v1309, %v1303
      %v1311 = vadd.f32 %v1310, %v1304
      %1312 = vadd.xlane.f32.xlu0 %v1311
      %v1313 = vpop.xlane.xlu0 %1312
      %v1314 = vrot.slane %v1313, 4
      %v1315 = vadd.f32 %v1313, %v1314
      %v1316 = vrot.slane %v1315, 2
      %v1317 = vadd.f32 %v1315, %v1316
      %v1318 = vrot.slane %v1317, 1
      %v1319 = vadd.f32 %v1317, %v1318
      %s1320 = vtos %v1319
      %s1321 = scalar_lea.smem [#allocation14], 2
      %1322 = sst [smem:[%s1321]] %s1320
      %v1323 = vld [vmem:[#allocation5] sm:$0xff]
      %v1324 = vld [vmem:[#allocation5 + $0x8] sm:$0xff]
      %v1325 = vld [vmem:[#allocation5 + $0x10] sm:$0xff]
      %v1326 = vld [vmem:[#allocation5 + $0x18] sm:$0xff]
      %v1327 = vld [vmem:[#allocation5 + $0x20] sm:$0xff]
      %v1328 = vld [vmem:[#allocation5 + $0x28] sm:$0xff]
      %v1329 = vld [vmem:[#allocation5 + $0x30] sm:$0xff]
      %v1330 = vld [vmem:[#allocation5 + $0x38] sm:$0xff]
      %v1331 = vadd.f32 %v1323, %v1324
      %v1332 = vadd.f32 %v1331, %v1325
      %v1333 = vadd.f32 %v1332, %v1326
      %v1334 = vadd.f32 %v1333, %v1327
      %v1335 = vadd.f32 %v1334, %v1328
      %v1336 = vadd.f32 %v1335, %v1329
      %v1337 = vadd.f32 %v1336, %v1330
      %1338 = vadd.xlane.f32.xlu0 %v1337
      %v1339 = vpop.xlane.xlu0 %1338
      %v1340 = vrot.slane %v1339, 4
      %v1341 = vadd.f32 %v1339, %v1340
      %v1342 = vrot.slane %v1341, 2
      %v1343 = vadd.f32 %v1341, %v1342
      %v1344 = vrot.slane %v1343, 1
      %v1345 = vadd.f32 %v1343, %v1344
      %s1346 = vtos %v1345
      %s1347 = scalar_lea.smem [#allocation14], 3
      %1348 = sst [smem:[%s1347]] %s1346
    $region45: #{tpu_custom_call.1} parent=1 // pred_fallthru
      _
    // Predicated region
    $region46: #{tpu_custom_call.1} parent=1 // pred_check
      _
    $region47: #{tpu_custom_call.1} parent=1 // pred_check_branch
      %1350 = sbr.rel (0) target = $region49
    $region48: #{tpu_custom_call.1} parent=1 // pred_region
      %s1352 = ssub.s32 16, 16
      %1353 = vsyncadd [#allocation8], %s1352
      %1356 = dma.smem_to_hbm [#allocation14], 16, %s4, [#allocation8]
    $region49: #{tpu_custom_call.1} parent=1 // pred_fallthru
      _
    // Predicated region
    $region50: #{tpu_custom_call.1} parent=1 // pred_check
      _
    $region51: #{tpu_custom_call.1} parent=1 // pred_check_branch
      %1358 = sbr.rel (0) target = $region53
    $region52: #{tpu_custom_call.1} parent=1 // pred_region
      %1359 = dma.done [#allocation8], 16
    $region53: #{tpu_custom_call.1} parent=1 // pred_fallthru
      _
    %1360 = sfence
    %1361 = vsyncpa [#allocation7], 1
    %1362 = vsyncpa [#allocation10], 1
    %1363 = vsyncpa [#allocation13], 1
    %1364 = vsyncpa [#allocation8], 1

</llo_original>
